<compile_context>
chip_gen: v7x
topology: tpu7x:2x2x1
jax: 0.10.0
libtpu: 0.0.40
codegen_flags: <defaults>
</compile_context>

<pallas_src>
import functools

import jax
import jax.numpy as jnp
from jax.experimental import pallas as pl
from jax.experimental.pallas import tpu as pltpu


def _round_up(x, m):
    return (x + m - 1) // m * m


def _layernorm(x, gamma, beta, eps=1e-5):
    # nn.LayerNorm semantics: mean/var over last dim, biased variance, eps=1e-5
    mean = jnp.mean(x, axis=-1, keepdims=True)
    var = jnp.mean((x - mean) ** 2, axis=-1, keepdims=True)
    return (x - mean) * jax.lax.rsqrt(var + eps) * gamma + beta


def transformer_kernel(x_ref, pos_ref, wqkv_ref, bqkv_ref, wproj_ref, vec_ref,
                       w1_ref, b1_ref, w2_ref, wfl_ref, bfl_ref, out_ref,
                       *, num_heads, dqk_pad, dv_pad):
    Nb, T, H = x_ref.shape
    V_pad = wfl_ref.shape[1]
    rows = Nb * T

    # Fused positional-embedding add (x never materialized in HBM).
    x3 = x_ref[...] + pos_ref[...][None, :, :]          # (Nb, T, H) f32
    x = x3.reshape(rows, H)                             # f32 (residual / LN path)
    xb = x.astype(jnp.bfloat16)                         # MXU operand

    # Packed per-row vector params: [bproj, g_mh, b_mh, b2, g_ff, b_ff, 0, 0]
    vec = vec_ref[...]                                  # (8, H) f32
    b_proj, g_mh, b_mh = vec[0:1], vec[1:2], vec[2:3]
    b_2, g_ff, b_ff = vec[3:4], vec[4:5], vec[5:6]

    # ---- fused QKV projection: one bf16 matmul produces Q/K/V for both heads.
    # Column layout per head: [q | k | v], each zero-padded to a multiple of
    # 128 lanes; q columns pre-scaled by 1/sqrt(dim_k) in the wrapper.
    qkv = jnp.dot(xb, wqkv_ref[...],
                  preferred_element_type=jnp.float32) + bqkv_ref[...]

    head_stride = 2 * dqk_pad + dv_pad
    o_heads = []
    for h in range(num_heads):                          # unrolled (2 heads)
        base = h * head_stride                          # 128-aligned offsets
        q = qkv[:, base: base + dqk_pad].reshape(Nb, T, dqk_pad)
        k = qkv[:, base + dqk_pad: base + 2 * dqk_pad].reshape(Nb, T, dqk_pad)
        v = qkv[:, base + 2 * dqk_pad: base + head_stride].reshape(Nb, T, dv_pad)
        # Contract last dims of both operands -> no explicit transpose of k.
        s = jnp.einsum('btd,bsd->bts', q.astype(jnp.bfloat16),
                       k.astype(jnp.bfloat16),
                       preferred_element_type=jnp.float32)       # (Nb, T, T)
        s = s - jnp.max(s, axis=-1, keepdims=True)
        p = jnp.exp(s)
        p = p / jnp.sum(p, axis=-1, keepdims=True)      # exact softmax (f32)
        o = jnp.einsum('bts,bsd->btd', p.astype(jnp.bfloat16),
                       v.astype(jnp.bfloat16),
                       preferred_element_type=jnp.float32)       # (Nb, T, dv_pad)
        o_heads.append(o.reshape(rows, dv_pad))

    # Head outputs occupy adjacent 128-aligned lane blocks -> the concat is
    # tile-aligned and the projection is a single K = num_heads*dv_pad matmul
    # (padded rows of wproj are zero, so padded lanes contribute nothing).
    o_cat = jnp.concatenate(o_heads, axis=-1).astype(jnp.bfloat16)
    proj = jnp.dot(o_cat, wproj_ref[...],
                   preferred_element_type=jnp.float32) + b_proj
    attn_out = _layernorm(proj + x, g_mh, b_mh)         # norm_mh (f32)

    # ---- feedforward ----
    h1 = jnp.dot(attn_out.astype(jnp.bfloat16), w1_ref[...],
                 preferred_element_type=jnp.float32) + b1_ref[...]
    h1 = jnp.maximum(h1, 0.0)                           # ReLU
    ff = jnp.dot(h1.astype(jnp.bfloat16), w2_ref[...],
                 preferred_element_type=jnp.float32) + b_2 + attn_out
    ff_out = _layernorm(ff, g_ff, b_ff)                 # norm_ff (f32)

    # ---- final classifier (lane-dense, padded to V_pad) ----
    out = jnp.dot(ff_out.astype(jnp.bfloat16), wfl_ref[...],
                  preferred_element_type=jnp.float32) + bfl_ref[...]
    out_ref[...] = out.reshape(Nb, T, V_pad)


def transformer_translator_forward(inputs, params, *, dim_k, dim_v, dim_q,
                                   block_n=None):
    """inputs: (N, T) int32 token ids. Returns (N, T, output_size) float32."""
    assert dim_q == dim_k, "q @ k^T requires dim_q == dim_k"
    num_heads = 2
    N, T = inputs.shape
    H = params["emb"].shape[1]
    V_out = params["wfl"].shape[1]

    # --- embedding glue (integer gathers) in plain JAX ---
    # TODO(synk): the word-embedding gather could move in-kernel via a
    # scalar-prefetched row-gather BlockSpec if it dominates HBM traffic.
    word_emb = params["emb"][inputs].astype(jnp.float32)            # (N, T, H)
    pos_emb = params["pos_emb"][jnp.arange(T)].astype(jnp.float32)  # (T, H)

    # --- batch tile: whole examples so attention stays inside one tile ---
    if block_n is None:
        block_n = max(1, min(N, 512 // max(T, 1)))
    N_pad = _round_up(N, block_n)
    if N_pad != N:
        word_emb = jnp.pad(word_emb, ((0, N_pad - N), (0, 0), (0, 0)))

    # --- pack / pad weights in the wrapper (one-time, outside the hot path) ---
    f32, bf16 = jnp.float32, jnp.bfloat16
    dqk_pad = _round_up(dim_q, 128)
    dv_pad = _round_up(dim_v, 128)
    inv_scale = 1.0 / jnp.sqrt(jnp.float32(dim_k))       # fold into Q projection

    def pad_cols(w, to):
        return jnp.pad(w.astype(f32), ((0, 0), (0, to - w.shape[1])))

    head_w, head_b = [], []
    for (wq, bq, wk, bk, wv, bv) in (
            (params["wq1"], params["bq1"], params["wk1"], params["bk1"],
             params["wv1"], params["bv1"]),
            (params["wq2"], params["bq2"], params["wk2"], params["bk2"],
             params["wv2"], params["bv2"])):
        head_w += [pad_cols(wq * inv_scale, dqk_pad), pad_cols(wk, dqk_pad),
                   pad_cols(wv, dv_pad)]
        head_b += [pad_cols(bq * inv_scale, dqk_pad), pad_cols(bk, dqk_pad),
                   pad_cols(bv, dv_pad)]
    w_qkv = jnp.concatenate(head_w, axis=1).astype(bf16)   # (H, 2*(2*dqk+dv)_pad)
    b_qkv = jnp.concatenate(head_b, axis=1).astype(f32)
    qkv_cols = w_qkv.shape[1]

    w_proj = jnp.zeros((num_heads * dv_pad, H), f32)
    w_proj = w_proj.at[0:dim_v].set(params["wproj"][0:dim_v].astype(f32))
    w_proj = w_proj.at[dv_pad:dv_pad + dim_v].set(
        params["wproj"][dim_v:2 * dim_v].astype(f32))
    w_proj = w_proj.astype(bf16)

    vec_params = jnp.concatenate(
        [params["bproj"], params["g_mh"], params["b_mh"],
         params["b2"], params["g_ff"], params["b_ff"],
         jnp.zeros((2, H), f32)], axis=0).astype(f32)        # (8, H)

    V_pad = _round_up(V_out, 128)                            # lane-dense output
    wfl_pad = jnp.pad(params["wfl"].astype(f32),
                      ((0, 0), (0, V_pad - V_out))).astype(bf16)
    bfl_pad = jnp.pad(params["bfl"].astype(f32), ((0, 0), (0, V_pad - V_out)))

    w1 = params["w1"].astype(bf16)
    b1 = params["b1"].astype(f32)
    w2 = params["w2"].astype(bf16)
    dff = w1.shape[1]

    kernel = functools.partial(transformer_kernel, num_heads=num_heads,
                               dqk_pad=dqk_pad, dv_pad=dv_pad)

    grid = (N_pad // block_n,)

    def resident(shape):
        # Constant index_map -> block stays VMEM-resident across grid steps.
        return pl.BlockSpec(shape, lambda i, _s=shape: (0,) * len(_s))

    # VMEM budget: resident weights + double-buffered activation tiles +
    # in-kernel f32 temporaries, with 2x margin, clamped to [32, 64] MiB.
    rows = block_n * T
    weight_bytes = sum(int(a.size) * a.dtype.itemsize for a in
                       (pos_emb, w_qkv, b_qkv, w_proj, vec_params, w1, b1, w2,
                        wfl_pad, bfl_pad))
    act_bytes = 2 * (rows * H * 4 + rows * V_pad * 4)
    tmp_bytes = (rows * (qkv_cols + num_heads * dv_pad + dff + V_pad + 6 * H) * 4
                 + 2 * num_heads * block_n * T * T * 4)
    vmem_limit = int(min(64 * 2 ** 20,
                         max(32 * 2 ** 20,
                             2 * (weight_bytes + act_bytes + tmp_bytes))))

    out_pad = pl.pallas_call(
        kernel,
        out_shape=jax.ShapeDtypeStruct((N_pad, T, V_pad), jnp.float32),
        grid=grid,
        in_specs=[
            pl.BlockSpec((block_n, T, H), lambda i: (i, 0, 0)),   # word emb (tiled)
            resident((T, H)),                                     # pos emb
            resident((H, qkv_cols)), resident((1, qkv_cols)),     # fused QKV
            resident((num_heads * dv_pad, H)),                    # head projection
            resident((8, H)),                                     # bias / LN slab
            resident((H, dff)), resident((1, dff)),               # FFN 1
            resident((dff, H)),                                   # FFN 2
            resident((H, V_pad)), resident((1, V_pad)),           # classifier
        ],
        out_specs=pl.BlockSpec((block_n, T, V_pad), lambda i: (i, 0, 0)),
        compiler_params=pltpu.CompilerParams(
            dimension_semantics=("parallel",),
            vmem_limit_bytes=vmem_limit),
    )(word_emb, pos_emb, w_qkv, b_qkv, w_proj, vec_params,
      w1, b1, w2, wfl_pad, bfl_pad)

    return out_pad[:N, :, :V_out]


def _reference_forward(inputs, params, *, dim_k, dim_v, dim_q):
    """Pure-JAX f32 reference matching the PyTorch module semantics."""
    T = inputs.shape[1]
    x = (params["emb"][inputs]
         + params["pos_emb"][jnp.arange(T)][None]).astype(jnp.float32)

    def head(wq, bq, wk, bk, wv, bv):
        q, k, v = x @ wq + bq, x @ wk + bk, x @ wv + bv
        s = jnp.einsum('btd,bsd->bts', q, k) / jnp.sqrt(jnp.float32(dim_k))
        p = jax.nn.softmax(s, axis=-1)
        return jnp.einsum('bts,bsd->btd', p, v)

    o1 = head(params["wq1"], params["bq1"], params["wk1"], params["bk1"],
              params["wv1"], params["bv1"])
    o2 = head(params["wq2"], params["bq2"], params["wk2"], params["bk2"],
              params["wv2"], params["bv2"])
    mh = jnp.concatenate([o1, o2], axis=-1) @ params["wproj"] + params["bproj"]
    a = _layernorm(mh + x, params["g_mh"], params["b_mh"])
    h = jnp.maximum(a @ params["w1"] + params["b1"], 0.0)
    f = _layernorm(h @ params["w2"] + params["b2"] + a,
                   params["g_ff"], params["b_ff"])
    return f @ params["wfl"] + params["bfl"]


def init_params(key, *, input_size, output_size, hidden_dim, dim_k, dim_v,
                dim_q, dim_feedforward, max_length):
    """Deterministic synthetic parameter init (matches module shapes)."""
    ks = jax.random.split(key, 16)
    s = 0.02

    def w(k, shape):
        return jax.random.normal(k, shape, jnp.float32) * s

    params = {
        "emb": w(ks[0], (input_size, hidden_dim)),
        "pos_emb": w(ks[1], (max_length, hidden_dim)),
        # per-head projections stored as (in, out) so the model does x @ W + b
        "wq1": w(ks[2], (hidden_dim, dim_q)), "bq1": jnp.zeros((1, dim_q), jnp.float32),
        "wk1": w(ks[3], (hidden_dim, dim_k)), "bk1": jnp.zeros((1, dim_k), jnp.float32),
        "wv1": w(ks[4], (hidden_dim, dim_v)), "bv1": jnp.zeros((1, dim_v), jnp.float32),
        "wq2": w(ks[5], (hidden_dim, dim_q)), "bq2": jnp.zeros((1, dim_q), jnp.float32),
        "wk2": w(ks[6], (hidden_dim, dim_k)), "bk2": jnp.zeros((1, dim_k), jnp.float32),
        "wv2": w(ks[7], (hidden_dim, dim_v)), "bv2": jnp.zeros((1, dim_v), jnp.float32),
        # attention head projection (2*dim_v -> hidden)
        "wproj": w(ks[8], (2 * dim_v, hidden_dim)),
        "bproj": jnp.zeros((1, hidden_dim), jnp.float32),
        # LayerNorm (multi-head)
        "g_mh": jnp.ones((1, hidden_dim), jnp.float32),
        "b_mh": jnp.zeros((1, hidden_dim), jnp.float32),
        # feedforward
        "w1": w(ks[9], (hidden_dim, dim_feedforward)),
        "b1": jnp.zeros((1, dim_feedforward), jnp.float32),
        "w2": w(ks[10], (dim_feedforward, hidden_dim)),
        "b2": jnp.zeros((1, hidden_dim), jnp.float32),
        # LayerNorm (feedforward)
        "g_ff": jnp.ones((1, hidden_dim), jnp.float32),
        "b_ff": jnp.zeros((1, hidden_dim), jnp.float32),
        # final classifier
        "wfl": w(ks[11], (hidden_dim, output_size)),
        "bfl": jnp.zeros((1, output_size), jnp.float32),
    }
    return params


if __name__ == "__main__":
    # Small shapes consistent with the module's forward.
    N, T = 2, 8
    input_size = 50        # source vocab
    output_size = 40       # target vocab
    hidden_dim = 32
    dim_k = dim_v = dim_q = 16
    dim_feedforward = 64
    max_length = 43

    key = jax.random.PRNGKey(0)
    k_params, k_inputs = jax.random.split(key)

    params = init_params(
        k_params,
        input_size=input_size, output_size=output_size,
        hidden_dim=hidden_dim, dim_k=dim_k, dim_v=dim_v, dim_q=dim_q,
        dim_feedforward=dim_feedforward, max_length=max_length)

    inputs = jax.random.randint(k_inputs, (N, T), 0, input_size, dtype=jnp.int32)

    # block_n=1 -> grid=(2,): exercises the tiled, double-buffered pipeline.
    out = transformer_translator_forward(inputs, params,
                                         dim_k=dim_k, dim_v=dim_v, dim_q=dim_q,
                                         block_n=1)
    jax.block_until_ready(out)

    assert out.shape == (N, T, output_size), out.shape
    assert out.dtype == jnp.float32

    # Loose-tolerance sanity check vs. a pure-JAX f32 reference (bf16 MXU
    # operands introduce small, bounded drift).
    ref = _reference_forward(inputs, params, dim_k=dim_k, dim_v=dim_v, dim_q=dim_q)
    err = float(jnp.max(jnp.abs(out - ref)))
    assert err < 3e-2, f"max abs error vs reference: {err}"

    print("KERNEL_OK")
</pallas_src>

<mosaic_0001>
module attributes {stable_mosaic.version = 11 : i64} {
  func.func @transformer_kernel(%arg0: i32, %arg1: memref<1x8x32xf32, #tpu.memory_space<vmem>>, %arg2: memref<8x32xf32, #tpu.memory_space<vmem>>, %arg3: memref<32x768xbf16, #tpu.memory_space<vmem>>, %arg4: memref<1x768xf32, #tpu.memory_space<vmem>>, %arg5: memref<256x32xbf16, #tpu.memory_space<vmem>>, %arg6: memref<8x32xf32, #tpu.memory_space<vmem>>, %arg7: memref<32x64xbf16, #tpu.memory_space<vmem>>, %arg8: memref<1x64xf32, #tpu.memory_space<vmem>>, %arg9: memref<64x32xbf16, #tpu.memory_space<vmem>>, %arg10: memref<32x128xbf16, #tpu.memory_space<vmem>>, %arg11: memref<1x128xf32, #tpu.memory_space<vmem>>, %arg12: memref<1x8x128xf32, #tpu.memory_space<vmem>>) attributes {dimension_semantics = [#tpu.dimension_semantics<parallel>], iteration_bounds = array<i64: 2>, scalar_prefetch = 0 : i64, scratch_operands = 0 : i64, tpu.core_type = #tpu.core_type<tc>, window_params = [{transform_indices = @transform_0, window_bounds = array<i64: 1, 8, 32>}, {pipeline_mode = #tpu.pipeline_mode<synchronous>, transform_indices = @transform_1, window_bounds = array<i64: 8, 32>}, {pipeline_mode = #tpu.pipeline_mode<synchronous>, transform_indices = @transform_2, window_bounds = array<i64: 32, 768>}, {pipeline_mode = #tpu.pipeline_mode<synchronous>, transform_indices = @transform_3, window_bounds = array<i64: 1, 768>}, {pipeline_mode = #tpu.pipeline_mode<synchronous>, transform_indices = @transform_4, window_bounds = array<i64: 256, 32>}, {pipeline_mode = #tpu.pipeline_mode<synchronous>, transform_indices = @transform_5, window_bounds = array<i64: 8, 32>}, {pipeline_mode = #tpu.pipeline_mode<synchronous>, transform_indices = @transform_6, window_bounds = array<i64: 32, 64>}, {pipeline_mode = #tpu.pipeline_mode<synchronous>, transform_indices = @transform_7, window_bounds = array<i64: 1, 64>}, {pipeline_mode = #tpu.pipeline_mode<synchronous>, transform_indices = @transform_8, window_bounds = array<i64: 64, 32>}, {pipeline_mode = #tpu.pipeline_mode<synchronous>, transform_indices = @transform_9, window_bounds = array<i64: 32, 128>}, {pipeline_mode = #tpu.pipeline_mode<synchronous>, transform_indices = @transform_10, window_bounds = array<i64: 1, 128>}, {transform_indices = @transform_11, window_bounds = array<i64: 1, 8, 128>}]} {
    %c0 = arith.constant 0 : index
    %c0_0 = arith.constant 0 : index
    %c0_1 = arith.constant 0 : index
    %0 = vector.load %arg1[%c0, %c0_0, %c0_1] : memref<1x8x32xf32, #tpu.memory_space<vmem>>, vector<1x8x32xf32>
    %c0_2 = arith.constant 0 : index
    %c0_3 = arith.constant 0 : index
    %1 = vector.load %arg2[%c0_2, %c0_3] : memref<8x32xf32, #tpu.memory_space<vmem>>, vector<8x32xf32>
    %2 = vector.shape_cast %1 : vector<8x32xf32> to vector<1x8x32xf32>
    %3 = arith.addf %0, %2 : vector<1x8x32xf32>
    %4 = vector.shape_cast %3 : vector<1x8x32xf32> to vector<8x32xf32>
    %5 = arith.truncf %4 : vector<8x32xf32> to vector<8x32xbf16>
    %c0_4 = arith.constant 0 : index
    %c0_5 = arith.constant 0 : index
    %6 = vector.load %arg6[%c0_4, %c0_5] : memref<8x32xf32, #tpu.memory_space<vmem>>, vector<8x32xf32>
    %7 = vector.extract_strided_slice %6 {offsets = [0, 0], sizes = [1, 32], strides = [1, 1]} : vector<8x32xf32> to vector<1x32xf32>
    %8 = vector.extract_strided_slice %6 {offsets = [1, 0], sizes = [1, 32], strides = [1, 1]} : vector<8x32xf32> to vector<1x32xf32>
    %9 = vector.extract_strided_slice %6 {offsets = [2, 0], sizes = [1, 32], strides = [1, 1]} : vector<8x32xf32> to vector<1x32xf32>
    %10 = vector.extract_strided_slice %6 {offsets = [3, 0], sizes = [1, 32], strides = [1, 1]} : vector<8x32xf32> to vector<1x32xf32>
    %11 = vector.extract_strided_slice %6 {offsets = [4, 0], sizes = [1, 32], strides = [1, 1]} : vector<8x32xf32> to vector<1x32xf32>
    %12 = vector.extract_strided_slice %6 {offsets = [5, 0], sizes = [1, 32], strides = [1, 1]} : vector<8x32xf32> to vector<1x32xf32>
    %c0_6 = arith.constant 0 : index
    %c0_7 = arith.constant 0 : index
    %13 = vector.load %arg3[%c0_6, %c0_7] : memref<32x768xbf16, #tpu.memory_space<vmem>>, vector<32x768xbf16>
    %cst = arith.constant dense<0.000000e+00> : vector<8x768xf32>
    %14 = tpu.matmul %5, %13, %cst {dimension_numbers = #tpu.dot_dimension_numbers<[1], [0], [0], [1], [0, 0, 1, 1], [], []>} : vector<8x32xbf16>, vector<32x768xbf16>, vector<8x768xf32> -> vector<8x768xf32>
    %c0_8 = arith.constant 0 : index
    %c0_9 = arith.constant 0 : index
    %15 = vector.load %arg4[%c0_8, %c0_9] : memref<1x768xf32, #tpu.memory_space<vmem>>, vector<1x768xf32>
    %16 = vector.broadcast %15 : vector<1x768xf32> to vector<8x768xf32>
    %17 = arith.addf %14, %16 : vector<8x768xf32>
    %18 = vector.extract_strided_slice %17 {offsets = [0, 0], sizes = [8, 128], strides = [1, 1]} : vector<8x768xf32> to vector<8x128xf32>
    %19 = vector.shape_cast %18 : vector<8x128xf32> to vector<1x8x128xf32>
    %20 = vector.extract_strided_slice %17 {offsets = [0, 128], sizes = [8, 128], strides = [1, 1]} : vector<8x768xf32> to vector<8x128xf32>
    %21 = vector.shape_cast %20 : vector<8x128xf32> to vector<1x8x128xf32>
    %22 = vector.extract_strided_slice %17 {offsets = [0, 256], sizes = [8, 128], strides = [1, 1]} : vector<8x768xf32> to vector<8x128xf32>
    %23 = vector.shape_cast %22 : vector<8x128xf32> to vector<1x8x128xf32>
    %24 = arith.truncf %19 : vector<1x8x128xf32> to vector<1x8x128xbf16>
    %25 = arith.truncf %21 : vector<1x8x128xf32> to vector<1x8x128xbf16>
    "tpu.trace_start"() <{level = 10 : i32, message = "btd,bsd->bts"}> : () -> ()
    %cst_10 = arith.constant dense<0.000000e+00> : vector<1x8x8xf32>
    %26 = tpu.matmul %24, %25, %cst_10 {dimension_numbers = #tpu.dot_dimension_numbers<[2], [2], [1], [1], [0, 0, 0, 1, 1, 1], [0], [0]>} : vector<1x8x128xbf16>, vector<1x8x128xbf16>, vector<1x8x8xf32> -> vector<1x8x8xf32>
    "tpu.trace_stop"() : () -> ()
    %cst_11 = arith.constant dense<0xFF800000> : vector<1x8xf32>
    %27 = vector.multi_reduction <maximumf>, %26, %cst_11 [2] : vector<1x8x8xf32> to vector<1x8xf32>
    %28 = vector.shape_cast %27 : vector<1x8xf32> to vector<1x8x1xf32>
    %29 = vector.broadcast %28 : vector<1x8x1xf32> to vector<1x8x8xf32>
    %30 = arith.subf %26, %29 : vector<1x8x8xf32>
    %31 = math.exp %30 : vector<1x8x8xf32>
    %cst_12 = arith.constant dense<0.000000e+00> : vector<1x8xf32>
    %32 = vector.multi_reduction <add>, %31, %cst_12 [2] : vector<1x8x8xf32> to vector<1x8xf32>
    %33 = vector.shape_cast %32 : vector<1x8xf32> to vector<1x8x1xf32>
    %34 = vector.broadcast %33 : vector<1x8x1xf32> to vector<1x8x8xf32>
    %35 = arith.divf %31, %34 : vector<1x8x8xf32>
    %36 = arith.truncf %35 : vector<1x8x8xf32> to vector<1x8x8xbf16>
    %37 = arith.truncf %23 : vector<1x8x128xf32> to vector<1x8x128xbf16>
    "tpu.trace_start"() <{level = 10 : i32, message = "bts,bsd->btd"}> : () -> ()
    %cst_13 = arith.constant dense<0.000000e+00> : vector<1x8x128xf32>
    %38 = tpu.matmul %36, %37, %cst_13 {dimension_numbers = #tpu.dot_dimension_numbers<[2], [1], [1], [2], [0, 0, 0, 1, 1, 2], [0], [0]>} : vector<1x8x8xbf16>, vector<1x8x128xbf16>, vector<1x8x128xf32> -> vector<1x8x128xf32>
    "tpu.trace_stop"() : () -> ()
    %39 = vector.shape_cast %38 : vector<1x8x128xf32> to vector<8x128xf32>
    %40 = vector.extract_strided_slice %17 {offsets = [0, 384], sizes = [8, 128], strides = [1, 1]} : vector<8x768xf32> to vector<8x128xf32>
    %41 = vector.shape_cast %40 : vector<8x128xf32> to vector<1x8x128xf32>
    %42 = vector.extract_strided_slice %17 {offsets = [0, 512], sizes = [8, 128], strides = [1, 1]} : vector<8x768xf32> to vector<8x128xf32>
    %43 = vector.shape_cast %42 : vector<8x128xf32> to vector<1x8x128xf32>
    %44 = vector.extract_strided_slice %17 {offsets = [0, 640], sizes = [8, 128], strides = [1, 1]} : vector<8x768xf32> to vector<8x128xf32>
    %45 = vector.shape_cast %44 : vector<8x128xf32> to vector<1x8x128xf32>
    %46 = arith.truncf %41 : vector<1x8x128xf32> to vector<1x8x128xbf16>
    %47 = arith.truncf %43 : vector<1x8x128xf32> to vector<1x8x128xbf16>
    "tpu.trace_start"() <{level = 10 : i32, message = "btd,bsd->bts"}> : () -> ()
    %cst_14 = arith.constant dense<0.000000e+00> : vector<1x8x8xf32>
    %48 = tpu.matmul %46, %47, %cst_14 {dimension_numbers = #tpu.dot_dimension_numbers<[2], [2], [1], [1], [0, 0, 0, 1, 1, 1], [0], [0]>} : vector<1x8x128xbf16>, vector<1x8x128xbf16>, vector<1x8x8xf32> -> vector<1x8x8xf32>
    "tpu.trace_stop"() : () -> ()
    %cst_15 = arith.constant dense<0xFF800000> : vector<1x8xf32>
    %49 = vector.multi_reduction <maximumf>, %48, %cst_15 [2] : vector<1x8x8xf32> to vector<1x8xf32>
    %50 = vector.shape_cast %49 : vector<1x8xf32> to vector<1x8x1xf32>
    %51 = vector.broadcast %50 : vector<1x8x1xf32> to vector<1x8x8xf32>
    %52 = arith.subf %48, %51 : vector<1x8x8xf32>
    %53 = math.exp %52 : vector<1x8x8xf32>
    %cst_16 = arith.constant dense<0.000000e+00> : vector<1x8xf32>
    %54 = vector.multi_reduction <add>, %53, %cst_16 [2] : vector<1x8x8xf32> to vector<1x8xf32>
    %55 = vector.shape_cast %54 : vector<1x8xf32> to vector<1x8x1xf32>
    %56 = vector.broadcast %55 : vector<1x8x1xf32> to vector<1x8x8xf32>
    %57 = arith.divf %53, %56 : vector<1x8x8xf32>
    %58 = arith.truncf %57 : vector<1x8x8xf32> to vector<1x8x8xbf16>
    %59 = arith.truncf %45 : vector<1x8x128xf32> to vector<1x8x128xbf16>
    "tpu.trace_start"() <{level = 10 : i32, message = "bts,bsd->btd"}> : () -> ()
    %cst_17 = arith.constant dense<0.000000e+00> : vector<1x8x128xf32>
    %60 = tpu.matmul %58, %59, %cst_17 {dimension_numbers = #tpu.dot_dimension_numbers<[2], [1], [1], [2], [0, 0, 0, 1, 1, 2], [0], [0]>} : vector<1x8x8xbf16>, vector<1x8x128xbf16>, vector<1x8x128xf32> -> vector<1x8x128xf32>
    "tpu.trace_stop"() : () -> ()
    %61 = vector.shape_cast %60 : vector<1x8x128xf32> to vector<8x128xf32>
    %62 = tpu.concatenate %39, %61 in 1 : vector<8x128xf32>, vector<8x128xf32> -> vector<8x256xf32>
    %63 = arith.truncf %62 : vector<8x256xf32> to vector<8x256xbf16>
    %c0_18 = arith.constant 0 : index
    %c0_19 = arith.constant 0 : index
    %64 = vector.load %arg5[%c0_18, %c0_19] : memref<256x32xbf16, #tpu.memory_space<vmem>>, vector<256x32xbf16>
    %cst_20 = arith.constant dense<0.000000e+00> : vector<8x32xf32>
    %65 = tpu.matmul %63, %64, %cst_20 {dimension_numbers = #tpu.dot_dimension_numbers<[1], [0], [0], [1], [0, 0, 1, 1], [], []>} : vector<8x256xbf16>, vector<256x32xbf16>, vector<8x32xf32> -> vector<8x32xf32>
    %66 = vector.broadcast %7 : vector<1x32xf32> to vector<8x32xf32>
    %67 = arith.addf %65, %66 : vector<8x32xf32>
    %68 = arith.addf %67, %4 : vector<8x32xf32>
    %cst_21 = arith.constant dense<0.000000e+00> : vector<8xf32>
    %69 = vector.multi_reduction <add>, %68, %cst_21 [1] : vector<8x32xf32> to vector<8xf32>
    %70 = vector.shape_cast %69 : vector<8xf32> to vector<8x1xf32>
    %cst_22 = arith.constant 3.200000e+01 : f32
    %71 = vector.broadcast %cst_22 : f32 to vector<8x1xf32>
    %72 = arith.divf %70, %71 : vector<8x1xf32>
    %73 = vector.broadcast %72 : vector<8x1xf32> to vector<8x32xf32>
    %74 = arith.subf %68, %73 : vector<8x32xf32>
    %75 = arith.mulf %74, %74 : vector<8x32xf32>
    %cst_23 = arith.constant dense<0.000000e+00> : vector<8xf32>
    %76 = vector.multi_reduction <add>, %75, %cst_23 [1] : vector<8x32xf32> to vector<8xf32>
    %77 = vector.shape_cast %76 : vector<8xf32> to vector<8x1xf32>
    %cst_24 = arith.constant 3.200000e+01 : f32
    %78 = vector.broadcast %cst_24 : f32 to vector<8x1xf32>
    %79 = arith.divf %77, %78 : vector<8x1xf32>
    %80 = vector.broadcast %72 : vector<8x1xf32> to vector<8x32xf32>
    %81 = arith.subf %68, %80 : vector<8x32xf32>
    %cst_25 = arith.constant 9.99999974E-6 : f32
    %82 = vector.broadcast %cst_25 : f32 to vector<8x1xf32>
    %83 = arith.addf %79, %82 : vector<8x1xf32>
    %84 = math.rsqrt %83 : vector<8x1xf32>
    %85 = vector.broadcast %84 : vector<8x1xf32> to vector<8x32xf32>
    %86 = arith.mulf %81, %85 : vector<8x32xf32>
    %87 = vector.broadcast %8 : vector<1x32xf32> to vector<8x32xf32>
    %88 = arith.mulf %86, %87 : vector<8x32xf32>
    %89 = vector.broadcast %9 : vector<1x32xf32> to vector<8x32xf32>
    %90 = arith.addf %88, %89 : vector<8x32xf32>
    %91 = arith.truncf %90 : vector<8x32xf32> to vector<8x32xbf16>
    %c0_26 = arith.constant 0 : index
    %c0_27 = arith.constant 0 : index
    %92 = vector.load %arg7[%c0_26, %c0_27] : memref<32x64xbf16, #tpu.memory_space<vmem>>, vector<32x64xbf16>
    %cst_28 = arith.constant dense<0.000000e+00> : vector<8x64xf32>
    %93 = tpu.matmul %91, %92, %cst_28 {dimension_numbers = #tpu.dot_dimension_numbers<[1], [0], [0], [1], [0, 0, 1, 1], [], []>} : vector<8x32xbf16>, vector<32x64xbf16>, vector<8x64xf32> -> vector<8x64xf32>
    %c0_29 = arith.constant 0 : index
    %c0_30 = arith.constant 0 : index
    %94 = vector.load %arg8[%c0_29, %c0_30] : memref<1x64xf32, #tpu.memory_space<vmem>>, vector<1x64xf32>
    %95 = vector.broadcast %94 : vector<1x64xf32> to vector<8x64xf32>
    %96 = arith.addf %93, %95 : vector<8x64xf32>
    %cst_31 = arith.constant 0.000000e+00 : f32
    %97 = vector.broadcast %cst_31 : f32 to vector<8x64xf32>
    %98 = arith.maximumf %96, %97 : vector<8x64xf32>
    %99 = arith.truncf %98 : vector<8x64xf32> to vector<8x64xbf16>
    %c0_32 = arith.constant 0 : index
    %c0_33 = arith.constant 0 : index
    %100 = vector.load %arg9[%c0_32, %c0_33] : memref<64x32xbf16, #tpu.memory_space<vmem>>, vector<64x32xbf16>
    %cst_34 = arith.constant dense<0.000000e+00> : vector<8x32xf32>
    %101 = tpu.matmul %99, %100, %cst_34 {dimension_numbers = #tpu.dot_dimension_numbers<[1], [0], [0], [1], [0, 0, 1, 1], [], []>} : vector<8x64xbf16>, vector<64x32xbf16>, vector<8x32xf32> -> vector<8x32xf32>
    %102 = vector.broadcast %10 : vector<1x32xf32> to vector<8x32xf32>
    %103 = arith.addf %101, %102 : vector<8x32xf32>
    %104 = arith.addf %103, %90 : vector<8x32xf32>
    %cst_35 = arith.constant dense<0.000000e+00> : vector<8xf32>
    %105 = vector.multi_reduction <add>, %104, %cst_35 [1] : vector<8x32xf32> to vector<8xf32>
    %106 = vector.shape_cast %105 : vector<8xf32> to vector<8x1xf32>
    %cst_36 = arith.constant 3.200000e+01 : f32
    %107 = vector.broadcast %cst_36 : f32 to vector<8x1xf32>
    %108 = arith.divf %106, %107 : vector<8x1xf32>
    %109 = vector.broadcast %108 : vector<8x1xf32> to vector<8x32xf32>
    %110 = arith.subf %104, %109 : vector<8x32xf32>
    %111 = arith.mulf %110, %110 : vector<8x32xf32>
    %cst_37 = arith.constant dense<0.000000e+00> : vector<8xf32>
    %112 = vector.multi_reduction <add>, %111, %cst_37 [1] : vector<8x32xf32> to vector<8xf32>
    %113 = vector.shape_cast %112 : vector<8xf32> to vector<8x1xf32>
    %cst_38 = arith.constant 3.200000e+01 : f32
    %114 = vector.broadcast %cst_38 : f32 to vector<8x1xf32>
    %115 = arith.divf %113, %114 : vector<8x1xf32>
    %116 = vector.broadcast %108 : vector<8x1xf32> to vector<8x32xf32>
    %117 = arith.subf %104, %116 : vector<8x32xf32>
    %cst_39 = arith.constant 9.99999974E-6 : f32
    %118 = vector.broadcast %cst_39 : f32 to vector<8x1xf32>
    %119 = arith.addf %115, %118 : vector<8x1xf32>
    %120 = math.rsqrt %119 : vector<8x1xf32>
    %121 = vector.broadcast %120 : vector<8x1xf32> to vector<8x32xf32>
    %122 = arith.mulf %117, %121 : vector<8x32xf32>
    %123 = vector.broadcast %11 : vector<1x32xf32> to vector<8x32xf32>
    %124 = arith.mulf %122, %123 : vector<8x32xf32>
    %125 = vector.broadcast %12 : vector<1x32xf32> to vector<8x32xf32>
    %126 = arith.addf %124, %125 : vector<8x32xf32>
    %127 = arith.truncf %126 : vector<8x32xf32> to vector<8x32xbf16>
    %c0_40 = arith.constant 0 : index
    %c0_41 = arith.constant 0 : index
    %128 = vector.load %arg10[%c0_40, %c0_41] : memref<32x128xbf16, #tpu.memory_space<vmem>>, vector<32x128xbf16>
    %cst_42 = arith.constant dense<0.000000e+00> : vector<8x128xf32>
    %129 = tpu.matmul %127, %128, %cst_42 {dimension_numbers = #tpu.dot_dimension_numbers<[1], [0], [0], [1], [0, 0, 1, 1], [], []>} : vector<8x32xbf16>, vector<32x128xbf16>, vector<8x128xf32> -> vector<8x128xf32>
    %c0_43 = arith.constant 0 : index
    %c0_44 = arith.constant 0 : index
    %130 = vector.load %arg11[%c0_43, %c0_44] : memref<1x128xf32, #tpu.memory_space<vmem>>, vector<1x128xf32>
    %131 = vector.broadcast %130 : vector<1x128xf32> to vector<8x128xf32>
    %132 = arith.addf %129, %131 : vector<8x128xf32>
    %133 = vector.shape_cast %132 : vector<8x128xf32> to vector<1x8x128xf32>
    %c0_45 = arith.constant 0 : index
    %c0_46 = arith.constant 0 : index
    %c0_47 = arith.constant 0 : index
    %134 = vector.load %arg12[%c0_45, %c0_46, %c0_47] : memref<1x8x128xf32, #tpu.memory_space<vmem>>, vector<1x8x128xf32>
    tpu.vector_store %arg12[%c0_45, %c0_46, %c0_47], %133 {strides = array<i32>} : memref<1x8x128xf32, #tpu.memory_space<vmem>>, vector<1x8x128xf32>,
    return
  }
  func.func @transform_0(%arg0: i32) -> (i32, i32, i32) {
    %c0_i32 = arith.constant 0 : i32
    %c0_i32_0 = arith.constant 0 : i32
    %c0_i32_1 = arith.constant 0 : i32
    return %arg0, %c0_i32, %c0_i32_0 : i32, i32, i32
  }
  func.func @transform_1(%arg0: i32) -> (i32, i32) {
    %c0_i32 = arith.constant 0 : i32
    %c0_i32_0 = arith.constant 0 : i32
    %c0_i32_1 = arith.constant 0 : i32
    return %c0_i32, %c0_i32_0 : i32, i32
  }
  func.func @transform_2(%arg0: i32) -> (i32, i32) {
    %c0_i32 = arith.constant 0 : i32
    %c0_i32_0 = arith.constant 0 : i32
    %c0_i32_1 = arith.constant 0 : i32
    return %c0_i32, %c0_i32_0 : i32, i32
  }
  func.func @transform_3(%arg0: i32) -> (i32, i32) {
    %c0_i32 = arith.constant 0 : i32
    %c0_i32_0 = arith.constant 0 : i32
    %c0_i32_1 = arith.constant 0 : i32
    return %c0_i32, %c0_i32_0 : i32, i32
  }
  func.func @transform_4(%arg0: i32) -> (i32, i32) {
    %c0_i32 = arith.constant 0 : i32
    %c0_i32_0 = arith.constant 0 : i32
    %c0_i32_1 = arith.constant 0 : i32
    return %c0_i32, %c0_i32_0 : i32, i32
  }
  func.func @transform_5(%arg0: i32) -> (i32, i32) {
    %c0_i32 = arith.constant 0 : i32
    %c0_i32_0 = arith.constant 0 : i32
    %c0_i32_1 = arith.constant 0 : i32
    return %c0_i32, %c0_i32_0 : i32, i32
  }
  func.func @transform_6(%arg0: i32) -> (i32, i32) {
    %c0_i32 = arith.constant 0 : i32
    %c0_i32_0 = arith.constant 0 : i32
    %c0_i32_1 = arith.constant 0 : i32
    return %c0_i32, %c0_i32_0 : i32, i32
  }
  func.func @transform_7(%arg0: i32) -> (i32, i32) {
    %c0_i32 = arith.constant 0 : i32
    %c0_i32_0 = arith.constant 0 : i32
    %c0_i32_1 = arith.constant 0 : i32
    return %c0_i32, %c0_i32_0 : i32, i32
  }
  func.func @transform_8(%arg0: i32) -> (i32, i32) {
    %c0_i32 = arith.constant 0 : i32
    %c0_i32_0 = arith.constant 0 : i32
    %c0_i32_1 = arith.constant 0 : i32
    return %c0_i32, %c0_i32_0 : i32, i32
  }
  func.func @transform_9(%arg0: i32) -> (i32, i32) {
    %c0_i32 = arith.constant 0 : i32
    %c0_i32_0 = arith.constant 0 : i32
    %c0_i32_1 = arith.constant 0 : i32
    return %c0_i32, %c0_i32_0 : i32, i32
  }
  func.func @transform_10(%arg0: i32) -> (i32, i32) {
    %c0_i32 = arith.constant 0 : i32
    %c0_i32_0 = arith.constant 0 : i32
    %c0_i32_1 = arith.constant 0 : i32
    return %c0_i32, %c0_i32_0 : i32, i32
  }
  func.func @transform_11(%arg0: i32) -> (i32, i32, i32) {
    %c0_i32 = arith.constant 0 : i32
    %c0_i32_0 = arith.constant 0 : i32
    %c0_i32_1 = arith.constant 0 : i32
    return %arg0, %c0_i32, %c0_i32_0 : i32, i32, i32
  }
}

</mosaic_0001>

<llo_original>
// kernel: tpu_custom_call.1
$region0: #{tpu_custom_call.1}
  #allocation0 [shape = 'u32[]', space=smem, size = 0x4, offset = 0x4, fixed_abs, tag = 'smem constant byte address 0x4 - core index']
  #allocation1 [shape = 'u32[144,128]{1,0:T(1,128)}', space=vmem, size = 0x12000, scoped, tag = 'internal scratch']
  %s0 = inlined_call_operand.vmem [shape: f32[2,8,32], index: 0, kind: input, shape index: {}]
  %s1 = inlined_call_operand.vmem [shape: f32[8,32], index: 1, kind: input, shape index: {}]
  %s2 = inlined_call_operand.vmem [shape: bf16[32,768], index: 2, kind: input, shape index: {}]
  %s3 = inlined_call_operand.vmem [shape: f32[1,768], index: 3, kind: input, shape index: {}]
  %s4 = inlined_call_operand.vmem [shape: bf16[256,32], index: 4, kind: input, shape index: {}]
  %s5 = inlined_call_operand.vmem [shape: f32[8,32], index: 5, kind: input, shape index: {}]
  %s6 = inlined_call_operand.vmem [shape: bf16[32,64], index: 6, kind: input, shape index: {}]
  %s7 = inlined_call_operand.vmem [shape: f32[1,64], index: 7, kind: input, shape index: {}]
  %s8 = inlined_call_operand.vmem [shape: bf16[64,32], index: 8, kind: input, shape index: {}]
  %s9 = inlined_call_operand.vmem [shape: bf16[32,128], index: 9, kind: input, shape index: {}]
  %s10 = inlined_call_operand.vmem [shape: f32[1,128], index: 10, kind: input, shape index: {}]
  %s11 = inlined_call_operand.hbm [shape: f32[2,8,128], index: 11, kind: output, shape index: {}]
  %s12 = sld [smem:[#allocation0]]
  $region77: #{tpu_custom_call.1} parent=0
    _
  %s14 = ssub.s32 1, %s12
  %s15 = scalar_select 0, %s14, %s12
  $region1: #{tpu_custom_call.1} parent=0
    #allocation2 [shape = 'u8[8192]{0}', space=vmem, size = 0x2000, scoped, tag = 'output window, operand 0']
    #allocation3 [shape = 's32[2]{0}', space=sflag, size = 0x8, scoped, tag = 'scoped memory for tpu_custom_call.1']
    %16 = vsyncpa [#allocation3], 0
    %s17 = scalar_lea.sflag [#allocation3], 1
    %18 = vsyncpa %s17, 0
    loop: start=0, step=1, limit=4
    $region2: #{tpu_custom_call.1} parent=1 // loop_pre_header
      _
    $region3: #{tpu_custom_call.1} parent=1 // loop_header
      %s20 = sphi 0, %s24
      %p21 = scmp.ge.s32.totalorder %s20, 4
      %s30 = sphi 0, %s32
      %s33 = sphi 0, %s30
      %s34 = sphi 0, %s33
      %s50 = sphi 0, %s34
      %s54 = sphi 0, %s54
      %s56 = sphi 0, %s54
      %s57 = sphi 0, %s56
      %s71 = sphi 0, %s57
      %s75 = sphi 0, %s75
      %s77 = sphi 0, %s75
      %s78 = sphi 0, %s77
      %s92 = sphi 0, %s78
      %s96 = sphi 0, %s96
      %s98 = sphi 0, %s96
      %s99 = sphi 0, %s98
      %s113 = sphi 0, %s99
      %s117 = sphi 0, %s117
      %s119 = sphi 0, %s117
      %s120 = sphi 0, %s119
      %s134 = sphi 0, %s120
      %s138 = sphi 0, %s138
      %s140 = sphi 0, %s138
      %s141 = sphi 0, %s140
      %s155 = sphi 0, %s141
      %s159 = sphi 0, %s159
      %s161 = sphi 0, %s159
      %s162 = sphi 0, %s161
      %s176 = sphi 0, %s162
      %s180 = sphi 0, %s180
      %s182 = sphi 0, %s180
      %s183 = sphi 0, %s182
      %s197 = sphi 0, %s183
      %s201 = sphi 0, %s201
      %s203 = sphi 0, %s201
      %s204 = sphi 0, %s203
      %s218 = sphi 0, %s204
      %s222 = sphi 0, %s222
      %s224 = sphi 0, %s222
      %s225 = sphi 0, %s224
      %s239 = sphi 0, %s225
      %s243 = sphi 0, %s243
      %s245 = sphi 0, %s243
      %s246 = sphi 0, %s245
      %s260 = sphi 0, %s246
      %s266 = sphi 0, %s268
      %s269 = sphi 0, %s266
      %s270 = sphi 0, %s269
      %s286 = sphi 0, %s270
    $region4: #{tpu_custom_call.1} parent=1 // loop_header_branch
      %23 = sbr.rel (%p21) target = $region8
    $region5: #{tpu_custom_call.1} parent=1 // loop_body
      %s25 = ssub.s32 %s20, 1
      %s26 = ssub.s32 %s20, 2
      %s27 = sadd.s32 %s20, 1
      %s28 = ssub.s32 %s20, %s27
      %p29 = scmp.eq.s32.totalorder %s28, 0
      %s31 = sadd.s32 %s30, 1
      %s32 = scalar_select %p29, %s30, %s31
      %p35 = pneg %p29
      %p36 = scmp.eq.s32.totalorder %s20, 1
      %p37 = por %p35, %p36
      %p38 = scmp.ne.s32.totalorder %s30, %s33
      %p39 = scmp.eq.s32.totalorder %s20, 0
      %p40 = por %p38, %p39
      %p41 = scmp.ne.s32.totalorder %s30, %s33
      %p42 = scmp.eq.s32.totalorder %s25, 1
      %p43 = por %p41, %p42
      %p44 = scmp.ne.s32.totalorder %s33, %s34
      %p45 = scmp.eq.s32.totalorder %s25, 0
      %p46 = por %p44, %p45
      %p47 = scmp.ne.s32.totalorder %s33, %s34
      %p48 = scmp.eq.s32.totalorder %s26, 1
      %p49 = por %p47, %p48
      %p51 = scmp.ne.s32.totalorder %s34, %s50
      %p52 = scmp.eq.s32.totalorder %s26, 0
      %p53 = por %p51, %p52
      %s55 = sadd.s32 %s54, 1
      %p58 = scmp.eq.s32.totalorder %s20, 1
      %p59 = scmp.ne.s32.totalorder %s54, %s56
      %p60 = scmp.eq.s32.totalorder %s20, 0
      %p61 = por %p59, %p60
      %p62 = scmp.ne.s32.totalorder %s54, %s56
      %p63 = scmp.eq.s32.totalorder %s25, 1
      %p64 = por %p62, %p63
      %p65 = scmp.ne.s32.totalorder %s56, %s57
      %p66 = scmp.eq.s32.totalorder %s25, 0
      %p67 = por %p65, %p66
      %p68 = scmp.ne.s32.totalorder %s56, %s57
      %p69 = scmp.eq.s32.totalorder %s26, 1
      %p70 = por %p68, %p69
      %p72 = scmp.ne.s32.totalorder %s57, %s71
      %p73 = scmp.eq.s32.totalorder %s26, 0
      %p74 = por %p72, %p73
      %s76 = sadd.s32 %s75, 1
      %p79 = scmp.eq.s32.totalorder %s20, 1
      %p80 = scmp.ne.s32.totalorder %s75, %s77
      %p81 = scmp.eq.s32.totalorder %s20, 0
      %p82 = por %p80, %p81
      %p83 = scmp.ne.s32.totalorder %s75, %s77
      %p84 = scmp.eq.s32.totalorder %s25, 1
      %p85 = por %p83, %p84
      %p86 = scmp.ne.s32.totalorder %s77, %s78
      %p87 = scmp.eq.s32.totalorder %s25, 0
      %p88 = por %p86, %p87
      %p89 = scmp.ne.s32.totalorder %s77, %s78
      %p90 = scmp.eq.s32.totalorder %s26, 1
      %p91 = por %p89, %p90
      %p93 = scmp.ne.s32.totalorder %s78, %s92
      %p94 = scmp.eq.s32.totalorder %s26, 0
      %p95 = por %p93, %p94
      %s97 = sadd.s32 %s96, 1
      %p100 = scmp.eq.s32.totalorder %s20, 1
      %p101 = scmp.ne.s32.totalorder %s96, %s98
      %p102 = scmp.eq.s32.totalorder %s20, 0
      %p103 = por %p101, %p102
      %p104 = scmp.ne.s32.totalorder %s96, %s98
      %p105 = scmp.eq.s32.totalorder %s25, 1
      %p106 = por %p104, %p105
      %p107 = scmp.ne.s32.totalorder %s98, %s99
      %p108 = scmp.eq.s32.totalorder %s25, 0
      %p109 = por %p107, %p108
      %p110 = scmp.ne.s32.totalorder %s98, %s99
      %p111 = scmp.eq.s32.totalorder %s26, 1
      %p112 = por %p110, %p111
      %p114 = scmp.ne.s32.totalorder %s99, %s113
      %p115 = scmp.eq.s32.totalorder %s26, 0
      %p116 = por %p114, %p115
      %s118 = sadd.s32 %s117, 1
      %p121 = scmp.eq.s32.totalorder %s20, 1
      %p122 = scmp.ne.s32.totalorder %s117, %s119
      %p123 = scmp.eq.s32.totalorder %s20, 0
      %p124 = por %p122, %p123
      %p125 = scmp.ne.s32.totalorder %s117, %s119
      %p126 = scmp.eq.s32.totalorder %s25, 1
      %p127 = por %p125, %p126
      %p128 = scmp.ne.s32.totalorder %s119, %s120
      %p129 = scmp.eq.s32.totalorder %s25, 0
      %p130 = por %p128, %p129
      %p131 = scmp.ne.s32.totalorder %s119, %s120
      %p132 = scmp.eq.s32.totalorder %s26, 1
      %p133 = por %p131, %p132
      %p135 = scmp.ne.s32.totalorder %s120, %s134
      %p136 = scmp.eq.s32.totalorder %s26, 0
      %p137 = por %p135, %p136
      %s139 = sadd.s32 %s138, 1
      %p142 = scmp.eq.s32.totalorder %s20, 1
      %p143 = scmp.ne.s32.totalorder %s138, %s140
      %p144 = scmp.eq.s32.totalorder %s20, 0
      %p145 = por %p143, %p144
      %p146 = scmp.ne.s32.totalorder %s138, %s140
      %p147 = scmp.eq.s32.totalorder %s25, 1
      %p148 = por %p146, %p147
      %p149 = scmp.ne.s32.totalorder %s140, %s141
      %p150 = scmp.eq.s32.totalorder %s25, 0
      %p151 = por %p149, %p150
      %p152 = scmp.ne.s32.totalorder %s140, %s141
      %p153 = scmp.eq.s32.totalorder %s26, 1
      %p154 = por %p152, %p153
      %p156 = scmp.ne.s32.totalorder %s141, %s155
      %p157 = scmp.eq.s32.totalorder %s26, 0
      %p158 = por %p156, %p157
      %s160 = sadd.s32 %s159, 1
      %p163 = scmp.eq.s32.totalorder %s20, 1
      %p164 = scmp.ne.s32.totalorder %s159, %s161
      %p165 = scmp.eq.s32.totalorder %s20, 0
      %p166 = por %p164, %p165
      %p167 = scmp.ne.s32.totalorder %s159, %s161
      %p168 = scmp.eq.s32.totalorder %s25, 1
      %p169 = por %p167, %p168
      %p170 = scmp.ne.s32.totalorder %s161, %s162
      %p171 = scmp.eq.s32.totalorder %s25, 0
      %p172 = por %p170, %p171
      %p173 = scmp.ne.s32.totalorder %s161, %s162
      %p174 = scmp.eq.s32.totalorder %s26, 1
      %p175 = por %p173, %p174
      %p177 = scmp.ne.s32.totalorder %s162, %s176
      %p178 = scmp.eq.s32.totalorder %s26, 0
      %p179 = por %p177, %p178
      %s181 = sadd.s32 %s180, 1
      %p184 = scmp.eq.s32.totalorder %s20, 1
      %p185 = scmp.ne.s32.totalorder %s180, %s182
      %p186 = scmp.eq.s32.totalorder %s20, 0
      %p187 = por %p185, %p186
      %p188 = scmp.ne.s32.totalorder %s180, %s182
      %p189 = scmp.eq.s32.totalorder %s25, 1
      %p190 = por %p188, %p189
      %p191 = scmp.ne.s32.totalorder %s182, %s183
      %p192 = scmp.eq.s32.totalorder %s25, 0
      %p193 = por %p191, %p192
      %p194 = scmp.ne.s32.totalorder %s182, %s183
      %p195 = scmp.eq.s32.totalorder %s26, 1
      %p196 = por %p194, %p195
      %p198 = scmp.ne.s32.totalorder %s183, %s197
      %p199 = scmp.eq.s32.totalorder %s26, 0
      %p200 = por %p198, %p199
      %s202 = sadd.s32 %s201, 1
      %p205 = scmp.eq.s32.totalorder %s20, 1
      %p206 = scmp.ne.s32.totalorder %s201, %s203
      %p207 = scmp.eq.s32.totalorder %s20, 0
      %p208 = por %p206, %p207
      %p209 = scmp.ne.s32.totalorder %s201, %s203
      %p210 = scmp.eq.s32.totalorder %s25, 1
      %p211 = por %p209, %p210
      %p212 = scmp.ne.s32.totalorder %s203, %s204
      %p213 = scmp.eq.s32.totalorder %s25, 0
      %p214 = por %p212, %p213
      %p215 = scmp.ne.s32.totalorder %s203, %s204
      %p216 = scmp.eq.s32.totalorder %s26, 1
      %p217 = por %p215, %p216
      %p219 = scmp.ne.s32.totalorder %s204, %s218
      %p220 = scmp.eq.s32.totalorder %s26, 0
      %p221 = por %p219, %p220
      %s223 = sadd.s32 %s222, 1
      %p226 = scmp.eq.s32.totalorder %s20, 1
      %p227 = scmp.ne.s32.totalorder %s222, %s224
      %p228 = scmp.eq.s32.totalorder %s20, 0
      %p229 = por %p227, %p228
      %p230 = scmp.ne.s32.totalorder %s222, %s224
      %p231 = scmp.eq.s32.totalorder %s25, 1
      %p232 = por %p230, %p231
      %p233 = scmp.ne.s32.totalorder %s224, %s225
      %p234 = scmp.eq.s32.totalorder %s25, 0
      %p235 = por %p233, %p234
      %p236 = scmp.ne.s32.totalorder %s224, %s225
      %p237 = scmp.eq.s32.totalorder %s26, 1
      %p238 = por %p236, %p237
      %p240 = scmp.ne.s32.totalorder %s225, %s239
      %p241 = scmp.eq.s32.totalorder %s26, 0
      %p242 = por %p240, %p241
      %s244 = sadd.s32 %s243, 1
      %p247 = scmp.eq.s32.totalorder %s20, 1
      %p248 = scmp.ne.s32.totalorder %s243, %s245
      %p249 = scmp.eq.s32.totalorder %s20, 0
      %p250 = por %p248, %p249
      %p251 = scmp.ne.s32.totalorder %s243, %s245
      %p252 = scmp.eq.s32.totalorder %s25, 1
      %p253 = por %p251, %p252
      %p254 = scmp.ne.s32.totalorder %s245, %s246
      %p255 = scmp.eq.s32.totalorder %s25, 0
      %p256 = por %p254, %p255
      %p257 = scmp.ne.s32.totalorder %s245, %s246
      %p258 = scmp.eq.s32.totalorder %s26, 1
      %p259 = por %p257, %p258
      %p261 = scmp.ne.s32.totalorder %s246, %s260
      %p262 = scmp.eq.s32.totalorder %s26, 0
      %p263 = por %p261, %p262
      %s264 = ssub.s32 %s20, %s27
      %p265 = scmp.eq.s32.totalorder %s264, 0
      %s267 = sadd.s32 %s266, 1
      %s268 = scalar_select %p265, %s266, %s267
      %p271 = pneg %p265
      %p272 = scmp.eq.s32.totalorder %s20, 1
      %p273 = por %p271, %p272
      %p274 = scmp.ne.s32.totalorder %s266, %s269
      %p275 = scmp.eq.s32.totalorder %s20, 0
      %p276 = por %p274, %p275
      %p277 = scmp.ne.s32.totalorder %s266, %s269
      %p278 = scmp.eq.s32.totalorder %s25, 1
      %p279 = por %p277, %p278
      %p280 = scmp.ne.s32.totalorder %s269, %s270
      %p281 = scmp.eq.s32.totalorder %s25, 0
      %p282 = por %p280, %p281
      %p283 = scmp.ne.s32.totalorder %s269, %s270
      %p284 = scmp.eq.s32.totalorder %s26, 1
      %p285 = por %p283, %p284
      %p287 = scmp.ne.s32.totalorder %s270, %s286
      %p288 = scmp.eq.s32.totalorder %s26, 0
      %p289 = por %p287, %p288
      %p290 = scmp.le.s32.totalorder 1, %s20
      %p291 = scmp.lt.s32.totalorder %s20, 3
      %p292 = pnand %p290, %p291
      %p293 = pneg %p292
      // Predicated region
      $region9: #{tpu_custom_call.1} parent=5 // pred_check
        _
      $region10: #{tpu_custom_call.1} parent=5 // pred_check_branch
        %295 = sbr.rel (%p292) target = $region12
      $region11: #{tpu_custom_call.1} parent=5 // pred_region
        %s296 = ssub.s32 %s20, 1
        // Predicated region
        $region13: #{tpu_custom_call.1} parent=11 // pred_check
          %p297 = pneg %p67
        $region14: #{tpu_custom_call.1} parent=11 // pred_check_branch
          %299 = sbr.rel (%p297) target = $region16
        $region15: #{tpu_custom_call.1} parent=11 // pred_region
          _
        $region16: #{tpu_custom_call.1} parent=11 // pred_fallthru
          _
        // Predicated region
        $region17: #{tpu_custom_call.1} parent=11 // pred_check
          %p300 = pneg %p88
        $region18: #{tpu_custom_call.1} parent=11 // pred_check_branch
          %302 = sbr.rel (%p300) target = $region20
        $region19: #{tpu_custom_call.1} parent=11 // pred_region
          _
        $region20: #{tpu_custom_call.1} parent=11 // pred_fallthru
          _
        // Predicated region
        $region21: #{tpu_custom_call.1} parent=11 // pred_check
          %p303 = pneg %p109
        $region22: #{tpu_custom_call.1} parent=11 // pred_check_branch
          %305 = sbr.rel (%p303) target = $region24
        $region23: #{tpu_custom_call.1} parent=11 // pred_region
          _
        $region24: #{tpu_custom_call.1} parent=11 // pred_fallthru
          _
        // Predicated region
        $region25: #{tpu_custom_call.1} parent=11 // pred_check
          %p306 = pneg %p130
        $region26: #{tpu_custom_call.1} parent=11 // pred_check_branch
          %308 = sbr.rel (%p306) target = $region28
        $region27: #{tpu_custom_call.1} parent=11 // pred_region
          _
        $region28: #{tpu_custom_call.1} parent=11 // pred_fallthru
          _
        // Predicated region
        $region29: #{tpu_custom_call.1} parent=11 // pred_check
          %p309 = pneg %p151
        $region30: #{tpu_custom_call.1} parent=11 // pred_check_branch
          %311 = sbr.rel (%p309) target = $region32
        $region31: #{tpu_custom_call.1} parent=11 // pred_region
          _
        $region32: #{tpu_custom_call.1} parent=11 // pred_fallthru
          _
        // Predicated region
        $region33: #{tpu_custom_call.1} parent=11 // pred_check
          %p312 = pneg %p172
        $region34: #{tpu_custom_call.1} parent=11 // pred_check_branch
          %314 = sbr.rel (%p312) target = $region36
        $region35: #{tpu_custom_call.1} parent=11 // pred_region
          _
        $region36: #{tpu_custom_call.1} parent=11 // pred_fallthru
          _
        // Predicated region
        $region37: #{tpu_custom_call.1} parent=11 // pred_check
          %p315 = pneg %p193
        $region38: #{tpu_custom_call.1} parent=11 // pred_check_branch
          %317 = sbr.rel (%p315) target = $region40
        $region39: #{tpu_custom_call.1} parent=11 // pred_region
          _
        $region40: #{tpu_custom_call.1} parent=11 // pred_fallthru
          _
        // Predicated region
        $region41: #{tpu_custom_call.1} parent=11 // pred_check
          %p318 = pneg %p214
        $region42: #{tpu_custom_call.1} parent=11 // pred_check_branch
          %320 = sbr.rel (%p318) target = $region44
        $region43: #{tpu_custom_call.1} parent=11 // pred_region
          _
        $region44: #{tpu_custom_call.1} parent=11 // pred_fallthru
          _
        // Predicated region
        $region45: #{tpu_custom_call.1} parent=11 // pred_check
          %p321 = pneg %p235
        $region46: #{tpu_custom_call.1} parent=11 // pred_check_branch
          %323 = sbr.rel (%p321) target = $region48
        $region47: #{tpu_custom_call.1} parent=11 // pred_region
          _
        $region48: #{tpu_custom_call.1} parent=11 // pred_fallthru
          _
        // Predicated region
        $region49: #{tpu_custom_call.1} parent=11 // pred_check
          %p324 = pneg %p256
        $region50: #{tpu_custom_call.1} parent=11 // pred_check_branch
          %326 = sbr.rel (%p324) target = $region52
        $region51: #{tpu_custom_call.1} parent=11 // pred_region
          _
        $region52: #{tpu_custom_call.1} parent=11 // pred_fallthru
          _
      $region12: #{tpu_custom_call.1} parent=5 // pred_fallthru
        _
      %p327 = scmp.lt.s32.totalorder %s20, 2
      // Predicated region
      $region53: #{tpu_custom_call.1} parent=5 // pred_check
        %p328 = pneg %p327
      $region54: #{tpu_custom_call.1} parent=5 // pred_check_branch
        %330 = sbr.rel (%p328) target = $region56
      $region55: #{tpu_custom_call.1} parent=5 // pred_region
        // Predicated region
        $region57: #{tpu_custom_call.1} parent=55 // pred_check
          %p331 = pneg %p40
        $region58: #{tpu_custom_call.1} parent=55 // pred_check_branch
          %333 = sbr.rel (%p331) target = $region60
        $region59: #{tpu_custom_call.1} parent=55 // pred_region
          %p334 = scmp.lt.s32.totalorder %s20, 1
          %s335 = scalar_select %p334, %s20, 1
          %s336 = smul.addr %s335, 8
          %s337 = scalar_lea.vmem %s0, %s336
        $region60: #{tpu_custom_call.1} parent=55 // pred_fallthru
          _
      $region56: #{tpu_custom_call.1} parent=5 // pred_fallthru
        _
      %p338 = scmp.le.s32.totalorder 1, %s20
      %p339 = scmp.lt.s32.totalorder %s20, 3
      %p340 = pnand %p338, %p339
      %p341 = pneg %p340
      // Predicated region
      $region61: #{tpu_custom_call.1} parent=5 // pred_check
        _
      $region62: #{tpu_custom_call.1} parent=5 // pred_check_branch
        %343 = sbr.rel (%p340) target = $region64
      $region63: #{tpu_custom_call.1} parent=5 // pred_region
        %s344 = ssub.s32 %s20, 1
        %p345 = scmp.lt.s32.totalorder %s25, 1
        %s346 = scalar_select %p345, %s25, 1
        %s347 = smul.addr %s346, 8
        %s348 = scalar_lea.vmem %s0, %s347
        %p349 = pneg %p46
        %p350 = pneg %p43
        %p351 = pneg %p67
        %p352 = pneg %p64
        %p353 = pneg %p88
        %p354 = pneg %p85
        %p355 = pneg %p109
        %p356 = pneg %p106
        %p357 = pneg %p130
        %p358 = pneg %p127
        %p359 = pneg %p151
        %p360 = pneg %p148
        %p361 = pneg %p172
        %p362 = pneg %p169
        %p363 = pneg %p193
        %p364 = pneg %p190
        %p365 = pneg %p214
        %p366 = pneg %p211
        %p367 = pneg %p235
        %p368 = pneg %p232
        %p369 = pneg %p256
        %p370 = pneg %p253
        %p371 = pneg %p282
        %p372 = pneg %p279
        %s373 = sand.u32 %s269, 1
        %s374 = scalar_lea.sflag [#allocation3], %s373
        %s375 = sand.u32 %s269, 1
        %s376 = smul.addr %s375, 8
        %s377 = scalar_lea.vmem [#allocation2], %s376
        %p378 = scmp.lt.s32.totalorder %s25, 1
        %s379 = scalar_select %p378, %s25, 1
        %s380 = smul.addr %s379, 8
        %s381 = scalar_lea.vmem %s0, %s380
        %v383 = vld [vmem:[%s381] sm:$0xff]
        %v384 = vld [vmem:[%s1] sm:$0xff]
        %v385 = vadd.f32 %v383, %v384
        %v386 = vpack.c.bf16 %v385, %v385
        %v387 = vld [vmem:[%s5] sm:$0xff]
        %v388 = vld [vmem:[%s2] sm:$0xff]
        %v389 = vld [vmem:[%s2 + $0x8] sm:$0xff]
        %v390 = vld [vmem:[%s2 + $0x10] sm:$0xff]
        %v391 = vld [vmem:[%s2 + $0x18] sm:$0xff]
        %v392 = vld [vmem:[%s2 + $0x20] sm:$0xff]
        %v393 = vld [vmem:[%s2 + $0x28] sm:$0xff]
        %v394 = vld [vmem:[%s2 + $0x30] sm:$0xff]
        %v395 = vld [vmem:[%s2 + $0x38] sm:$0xff]
        %v396 = vld [vmem:[%s2 + $0x40] sm:$0xff]
        %v397 = vld [vmem:[%s2 + $0x48] sm:$0xff]
        %v398 = vld [vmem:[%s2 + $0x50] sm:$0xff]
        %v399 = vld [vmem:[%s2 + $0x58] sm:$0xff]
        %v400 = vld [vmem:[%s3] sm:$0x3f]
        %v402 = vlaneseq
        %v403 = vshrl.u32 %v402, 7
        %v404 = vsub.s32 0, %v403
        %v405 = vrot.slane %v400, %v404
        %v406 = vlaneseq
        %v407 = vshrl.u32 %v406, 7
        %v408 = vsub.s32 1, %v407
        %v409 = vrot.slane %v400, %v408
        %v410 = vlaneseq
        %v411 = vshrl.u32 %v410, 7
        %v412 = vsub.s32 2, %v411
        %v413 = vrot.slane %v400, %v412
        %v414 = vlaneseq
        %v415 = vshrl.u32 %v414, 7
        %v416 = vsub.s32 3, %v415
        %v417 = vrot.slane %v400, %v416
        %v418 = vlaneseq
        %v419 = vshrl.u32 %v418, 7
        %v420 = vsub.s32 4, %v419
        %v421 = vrot.slane %v400, %v420
        %v422 = vlaneseq
        %v423 = vshrl.u32 %v422, 7
        %v424 = vsub.s32 5, %v423
        %v425 = vrot.slane %v400, %v424
        %v444 = vunpack.c.l.b16 %v388
        %v445 = vunpack.c.h.b16 %v388
        %v446 = vunpack.c.l.b16 %v389
        %v447 = vunpack.c.h.b16 %v389
        %v448 = vunpack.c.l.b16 %v390
        %v449 = vunpack.c.h.b16 %v390
        %v450 = vunpack.c.l.b16 %v391
        %v451 = vunpack.c.h.b16 %v391
        %v452 = vunpack.c.l.b16 %v392
        %v453 = vunpack.c.h.b16 %v392
        %v454 = vunpack.c.l.b16 %v393
        %v455 = vunpack.c.h.b16 %v393
        %v456 = vunpack.c.l.b16 %v394
        %v457 = vunpack.c.h.b16 %v394
        %v458 = vunpack.c.l.b16 %v395
        %v459 = vunpack.c.h.b16 %v395
        %v460 = vunpack.c.l.b16 %v396
        %v461 = vunpack.c.h.b16 %v396
        %v462 = vunpack.c.l.b16 %v397
        %v463 = vunpack.c.h.b16 %v397
        %v464 = vunpack.c.l.b16 %v398
        %v465 = vunpack.c.h.b16 %v398
        %v466 = vunpack.c.l.b16 %v399
        %v467 = vunpack.c.h.b16 %v399
        %v468 = vpack.c.b16 %v450, %v444
        %v469 = vpack.c.b16 %v451, %v445
        %v470 = vpack.c.b16 %v452, %v446
        %v471 = vpack.c.b16 %v453, %v447
        %v472 = vpack.c.b16 %v454, %v448
        %v473 = vpack.c.b16 %v455, %v449
        %v474 = vpack.c.b16 %v462, %v456
        %v475 = vpack.c.b16 %v463, %v457
        %v476 = vpack.c.b16 %v464, %v458
        %v477 = vpack.c.b16 %v465, %v459
        %v478 = vpack.c.b16 %v466, %v460
        %v479 = vpack.c.b16 %v467, %v461
        %vm492 = vcmask 261120
        %v494 = vsel %vm492, %v386, 0
        %496 = vmatprep.subr.bf16.mxu0 %v469
        %497 = vmatpush1.bf16.msra.mxu0 %v468
        %498 = vmatprep.subr.bf16.mxu0 %v475
        %499 = vmatpush1.bf16.msra.mxu0 %v474
        %500 = vmatprep.subr.bf16.mxu0 0
        %501 = vmatpush1.bf16.msra.mxu0 0
        %502 = vmatprep.subr.bf16.mxu0 0
        %503 = vmatpush1.bf16.msra.mxu0 0
        %504 = vmatprep.subr.bf16.mxu0 0
        %505 = vmatpush1.bf16.msra.mxu0 0
        %506 = vmatprep.subr.bf16.mxu0 0
        %507 = vmatpush1.bf16.msra.mxu0 0
        %508 = vmatprep.subr.bf16.mxu0 0
        %509 = vmatpush1.bf16.msra.mxu0 0
        %510 = vmatprep.subr.bf16.mxu0 0
        %511 = vmatpush1.bf16.msra.mxu0 0
        %512 = vmatprep.subr.bf16.mxu0 0
        %513 = vmatpush1.bf16.msra.mxu0 0
        %514 = vmatprep.subr.bf16.mxu0 0
        %515 = vmatpush1.bf16.msra.mxu0 0
        %516 = vmatprep.subr.bf16.mxu0 0
        %517 = vmatpush1.bf16.msra.mxu0 0
        %518 = vmatprep.subr.bf16.mxu0 0
        %519 = vmatpush1.bf16.msra.mxu0 0
        %520 = vmatprep.subr.bf16.mxu0 0
        %521 = vmatpush1.bf16.msra.mxu0 0
        %522 = vmatprep.subr.bf16.mxu0 0
        %523 = vmatpush1.bf16.msra.mxu0 0
        %524 = vmatprep.subr.bf16.mxu0 0
        %525 = vmatpush1.bf16.msra.mxu0 0
        %526 = vmatprep.subr.bf16.mxu0 0
        %527 = vmatpush1.bf16.msra.mxu0 0
        %528 = vmatprep.mubr.bf16.mxu0 0
        %529 = vmatmul.mubr.bf16.gmra.mrb[0].mxu0 %v494
        %v530 = vpop.f32.mrb[0].mxu0
        %v531 = vadd.f32 %v405, %v530
        %v532 = vpop.f32.mrb[0].mxu0
        %v533 = vadd.f32 %v409, %v532
        %v534 = vpop.f32.mrb[0].mxu0
        %v535 = vpop.f32.mrb[0].mxu0
        %536 = vdwg.mxu0
        %537 = vmatprep.subr.bf16.mxu0 %v471
        %538 = vmatpush1.bf16.msra.mxu0 %v470
        %539 = vmatprep.subr.bf16.mxu0 %v477
        %540 = vmatpush1.bf16.msra.mxu0 %v476
        %541 = vmatprep.subr.bf16.mxu0 0
        %542 = vmatpush1.bf16.msra.mxu0 0
        %543 = vmatprep.subr.bf16.mxu0 0
        %544 = vmatpush1.bf16.msra.mxu0 0
        %545 = vmatprep.subr.bf16.mxu0 0
        %546 = vmatpush1.bf16.msra.mxu0 0
        %547 = vmatprep.subr.bf16.mxu0 0
        %548 = vmatpush1.bf16.msra.mxu0 0
        %549 = vmatprep.subr.bf16.mxu0 0
        %550 = vmatpush1.bf16.msra.mxu0 0
        %551 = vmatprep.subr.bf16.mxu0 0
        %552 = vmatpush1.bf16.msra.mxu0 0
        %553 = vmatprep.subr.bf16.mxu0 0
        %554 = vmatpush1.bf16.msra.mxu0 0
        %555 = vmatprep.subr.bf16.mxu0 0
        %556 = vmatpush1.bf16.msra.mxu0 0
        %557 = vmatprep.subr.bf16.mxu0 0
        %558 = vmatpush1.bf16.msra.mxu0 0
        %559 = vmatprep.subr.bf16.mxu0 0
        %560 = vmatpush1.bf16.msra.mxu0 0
        %561 = vmatprep.subr.bf16.mxu0 0
        %562 = vmatpush1.bf16.msra.mxu0 0
        %563 = vmatprep.subr.bf16.mxu0 0
        %564 = vmatpush1.bf16.msra.mxu0 0
        %565 = vmatprep.subr.bf16.mxu0 0
        %566 = vmatpush1.bf16.msra.mxu0 0
        %567 = vmatprep.subr.bf16.mxu0 0
        %568 = vmatpush1.bf16.msra.mxu0 0
        %569 = vmatprep.mubr.bf16.mxu0 0
        %570 = vmatmul.mubr.bf16.gmra.mrb[0].mxu0 %v494
        %v571 = vpop.f32.mrb[0].mxu0
        %v572 = vadd.f32 %v413, %v571
        %v573 = vpop.f32.mrb[0].mxu0
        %v574 = vadd.f32 %v417, %v573
        %v575 = vpop.f32.mrb[0].mxu0
        %v576 = vpop.f32.mrb[0].mxu0
        %577 = vdwg.mxu0
        %578 = vmatprep.subr.bf16.mxu0 %v473
        %579 = vmatpush1.bf16.msra.mxu0 %v472
        %580 = vmatprep.subr.bf16.mxu0 %v479
        %581 = vmatpush1.bf16.msra.mxu0 %v478
        %582 = vmatprep.subr.bf16.mxu0 0
        %583 = vmatpush1.bf16.msra.mxu0 0
        %584 = vmatprep.subr.bf16.mxu0 0
        %585 = vmatpush1.bf16.msra.mxu0 0
        %586 = vmatprep.subr.bf16.mxu0 0
        %587 = vmatpush1.bf16.msra.mxu0 0
        %588 = vmatprep.subr.bf16.mxu0 0
        %589 = vmatpush1.bf16.msra.mxu0 0
        %590 = vmatprep.subr.bf16.mxu0 0
        %591 = vmatpush1.bf16.msra.mxu0 0
        %592 = vmatprep.subr.bf16.mxu0 0
        %593 = vmatpush1.bf16.msra.mxu0 0
        %594 = vmatprep.subr.bf16.mxu0 0
        %595 = vmatpush1.bf16.msra.mxu0 0
        %596 = vmatprep.subr.bf16.mxu0 0
        %597 = vmatpush1.bf16.msra.mxu0 0
        %598 = vmatprep.subr.bf16.mxu0 0
        %599 = vmatpush1.bf16.msra.mxu0 0
        %600 = vmatprep.subr.bf16.mxu0 0
        %601 = vmatpush1.bf16.msra.mxu0 0
        %602 = vmatprep.subr.bf16.mxu0 0
        %603 = vmatpush1.bf16.msra.mxu0 0
        %604 = vmatprep.subr.bf16.mxu0 0
        %605 = vmatpush1.bf16.msra.mxu0 0
        %606 = vmatprep.subr.bf16.mxu0 0
        %607 = vmatpush1.bf16.msra.mxu0 0
        %608 = vmatprep.subr.bf16.mxu0 0
        %609 = vmatpush1.bf16.msra.mxu0 0
        %610 = vmatprep.mubr.bf16.mxu0 0
        %611 = vmatmul.mubr.bf16.gmra.mrb[0].mxu0 %v494
        %v612 = vpop.f32.mrb[0].mxu0
        %v613 = vadd.f32 %v421, %v612
        %v614 = vpop.f32.mrb[0].mxu0
        %v615 = vadd.f32 %v425, %v614
        %v616 = vpop.f32.mrb[0].mxu0
        %v617 = vpop.f32.mrb[0].mxu0
        %618 = vdwg.mxu0
        %v619 = vpack.c.bf16 %v531, %v531
        %v620 = vpack.c.bf16 %v533, %v533
        %621 = vmatprep.subr.bf16.mxu0 0
        %622 = vmatpush1.bf16.xpose.msra.mxu0 %v620
        %623 = vmatprep.subr.bf16.mxu0 0
        %624 = vmatpush1.bf16.xpose.msra.mxu0 0
        %625 = vmatprep.subr.bf16.mxu0 0
        %626 = vmatpush1.bf16.xpose.msra.mxu0 0
        %627 = vmatprep.subr.bf16.mxu0 0
        %628 = vmatpush1.bf16.xpose.msra.mxu0 0
        %629 = vmatprep.subr.bf16.mxu0 0
        %630 = vmatpush1.bf16.xpose.msra.mxu0 0
        %631 = vmatprep.subr.bf16.mxu0 0
        %632 = vmatpush1.bf16.xpose.msra.mxu0 0
        %633 = vmatprep.subr.bf16.mxu0 0
        %634 = vmatpush1.bf16.xpose.msra.mxu0 0
        %635 = vmatprep.subr.bf16.mxu0 0
        %636 = vmatpush1.bf16.xpose.msra.mxu0 0
        %637 = vmatprep.subr.bf16.mxu0 0
        %638 = vmatpush1.bf16.xpose.msra.mxu0 0
        %639 = vmatprep.subr.bf16.mxu0 0
        %640 = vmatpush1.bf16.xpose.msra.mxu0 0
        %641 = vmatprep.subr.bf16.mxu0 0
        %642 = vmatpush1.bf16.xpose.msra.mxu0 0
        %643 = vmatprep.subr.bf16.mxu0 0
        %644 = vmatpush1.bf16.xpose.msra.mxu0 0
        %645 = vmatprep.subr.bf16.mxu0 0
        %646 = vmatpush1.bf16.xpose.msra.mxu0 0
        %647 = vmatprep.subr.bf16.mxu0 0
        %648 = vmatpush1.bf16.xpose.msra.mxu0 0
        %649 = vmatprep.subr.bf16.mxu0 0
        %650 = vmatpush1.bf16.xpose.msra.mxu0 0
        %651 = vmatprep.subr.bf16.mxu0 0
        %652 = vmatpush1.bf16.xpose.msra.mxu0 0
        %653 = vmatprep.mubr.bf16.mxu0 0
        %654 = vmatmul.mubr.bf16.gmra.mrb[0].mxu0 %v619
        %v655 = vpop.f32.mrb[0].mxu0
        %v656 = vadd.f32 0.0, %v655
        %v657 = vpop.f32.mrb[0].mxu0
        %v658 = vpop.f32.mrb[0].mxu0
        %v659 = vpop.f32.mrb[0].mxu0
        %660 = vdwg.mxu0
        %vm661 = vcmask 64512
        %v662 = vsel %vm661, %v656, -inf
        %663 = vmax.xlane.f32.xlu0 %v662
        %v664 = vpop.xlane.xlu0 %663
        %v665 = vsub.f32 %v656, %v664
        %v666 = vmul.f32 %v665, 1.442695
        %v667 = vpow.pop %v666
        %v668 = vsel %vm661, %v667, 0.0
        %669 = vadd.xlane.f32.xlu0 %v668
        %v670 = vpop.xlane.xlu0 %669
        %v671 = vrcp.pop %v670
        %v672 = vmul.f32 %v667, %v671
        %v673 = vpack.c.bf16 %v672, %v672
        %v674 = vpack.c.bf16 %v572, %v572
        %v676 = vsel %vm661, %v673, 0
        %vm678 = vcmask 1043456
        %v680 = vsel %vm678, %v674, 0
        %682 = vmatprep.subr.bf16.mxu0 0
        %683 = vmatpush1.bf16.msra.mxu0 %v680
        %684 = vmatprep.subr.bf16.mxu0 0
        %685 = vmatpush1.bf16.msra.mxu0 0
        %686 = vmatprep.subr.bf16.mxu0 0
        %687 = vmatpush1.bf16.msra.mxu0 0
        %688 = vmatprep.subr.bf16.mxu0 0
        %689 = vmatpush1.bf16.msra.mxu0 0
        %690 = vmatprep.subr.bf16.mxu0 0
        %691 = vmatpush1.bf16.msra.mxu0 0
        %692 = vmatprep.subr.bf16.mxu0 0
        %693 = vmatpush1.bf16.msra.mxu0 0
        %694 = vmatprep.subr.bf16.mxu0 0
        %695 = vmatpush1.bf16.msra.mxu0 0
        %696 = vmatprep.subr.bf16.mxu0 0
        %697 = vmatpush1.bf16.msra.mxu0 0
        %698 = vmatprep.subr.bf16.mxu0 0
        %699 = vmatpush1.bf16.msra.mxu0 0
        %700 = vmatprep.subr.bf16.mxu0 0
        %701 = vmatpush1.bf16.msra.mxu0 0
        %702 = vmatprep.subr.bf16.mxu0 0
        %703 = vmatpush1.bf16.msra.mxu0 0
        %704 = vmatprep.subr.bf16.mxu0 0
        %705 = vmatpush1.bf16.msra.mxu0 0
        %706 = vmatprep.subr.bf16.mxu0 0
        %707 = vmatpush1.bf16.msra.mxu0 0
        %708 = vmatprep.subr.bf16.mxu0 0
        %709 = vmatpush1.bf16.msra.mxu0 0
        %710 = vmatprep.subr.bf16.mxu0 0
        %711 = vmatpush1.bf16.msra.mxu0 0
        %712 = vmatprep.subr.bf16.mxu0 0
        %713 = vmatpush1.bf16.msra.mxu0 0
        %714 = vmatprep.mubr.bf16.mxu0 0
        %715 = vmatmul.mubr.bf16.gmra.mrb[0].mxu0 %v676
        %v716 = vpop.f32.mrb[0].mxu0
        %v717 = vadd.f32 0.0, %v716
        %v718 = vpop.f32.mrb[0].mxu0
        %v719 = vpop.f32.mrb[0].mxu0
        %v720 = vpop.f32.mrb[0].mxu0
        %721 = vdwg.mxu0
        %v722 = vpack.c.bf16 %v574, %v574
        %v723 = vpack.c.bf16 %v613, %v613
        %724 = vmatprep.subr.bf16.mxu0 0
        %725 = vmatpush1.bf16.xpose.msra.mxu0 %v723
        %726 = vmatprep.subr.bf16.mxu0 0
        %727 = vmatpush1.bf16.xpose.msra.mxu0 0
        %728 = vmatprep.subr.bf16.mxu0 0
        %729 = vmatpush1.bf16.xpose.msra.mxu0 0
        %730 = vmatprep.subr.bf16.mxu0 0
        %731 = vmatpush1.bf16.xpose.msra.mxu0 0
        %732 = vmatprep.subr.bf16.mxu0 0
        %733 = vmatpush1.bf16.xpose.msra.mxu0 0
        %734 = vmatprep.subr.bf16.mxu0 0
        %735 = vmatpush1.bf16.xpose.msra.mxu0 0
        %736 = vmatprep.subr.bf16.mxu0 0
        %737 = vmatpush1.bf16.xpose.msra.mxu0 0
        %738 = vmatprep.subr.bf16.mxu0 0
        %739 = vmatpush1.bf16.xpose.msra.mxu0 0
        %740 = vmatprep.subr.bf16.mxu0 0
        %741 = vmatpush1.bf16.xpose.msra.mxu0 0
        %742 = vmatprep.subr.bf16.mxu0 0
        %743 = vmatpush1.bf16.xpose.msra.mxu0 0
        %744 = vmatprep.subr.bf16.mxu0 0
        %745 = vmatpush1.bf16.xpose.msra.mxu0 0
        %746 = vmatprep.subr.bf16.mxu0 0
        %747 = vmatpush1.bf16.xpose.msra.mxu0 0
        %748 = vmatprep.subr.bf16.mxu0 0
        %749 = vmatpush1.bf16.xpose.msra.mxu0 0
        %750 = vmatprep.subr.bf16.mxu0 0
        %751 = vmatpush1.bf16.xpose.msra.mxu0 0
        %752 = vmatprep.subr.bf16.mxu0 0
        %753 = vmatpush1.bf16.xpose.msra.mxu0 0
        %754 = vmatprep.subr.bf16.mxu0 0
        %755 = vmatpush1.bf16.xpose.msra.mxu0 0
        %756 = vmatprep.mubr.bf16.mxu0 0
        %757 = vmatmul.mubr.bf16.gmra.mrb[0].mxu0 %v722
        %v758 = vpop.f32.mrb[0].mxu0
        %v759 = vadd.f32 0.0, %v758
        %v760 = vpop.f32.mrb[0].mxu0
        %v761 = vpop.f32.mrb[0].mxu0
        %v762 = vpop.f32.mrb[0].mxu0
        %763 = vdwg.mxu0
        %v764 = vsel %vm661, %v759, -inf
        %765 = vmax.xlane.f32.xlu0 %v764
        %v766 = vpop.xlane.xlu0 %765
        %v767 = vsub.f32 %v759, %v766
        %v768 = vmul.f32 %v767, 1.442695
        %v769 = vpow.pop %v768
        %v770 = vsel %vm661, %v769, 0.0
        %771 = vadd.xlane.f32.xlu0 %v770
        %v772 = vpop.xlane.xlu0 %771
        %v773 = vrcp.pop %v772
        %v774 = vmul.f32 %v769, %v773
        %v775 = vpack.c.bf16 %v774, %v774
        %v776 = vpack.c.bf16 %v615, %v615
        %v778 = vsel %vm661, %v775, 0
        %v781 = vsel %vm678, %v776, 0
        %783 = vmatprep.subr.bf16.mxu0 0
        %784 = vmatpush1.bf16.msra.mxu0 %v781
        %785 = vmatprep.subr.bf16.mxu0 0
        %786 = vmatpush1.bf16.msra.mxu0 0
        %787 = vmatprep.subr.bf16.mxu0 0
        %788 = vmatpush1.bf16.msra.mxu0 0
        %789 = vmatprep.subr.bf16.mxu0 0
        %790 = vmatpush1.bf16.msra.mxu0 0
        %791 = vmatprep.subr.bf16.mxu0 0
        %792 = vmatpush1.bf16.msra.mxu0 0
        %793 = vmatprep.subr.bf16.mxu0 0
        %794 = vmatpush1.bf16.msra.mxu0 0
        %795 = vmatprep.subr.bf16.mxu0 0
        %796 = vmatpush1.bf16.msra.mxu0 0
        %797 = vmatprep.subr.bf16.mxu0 0
        %798 = vmatpush1.bf16.msra.mxu0 0
        %799 = vmatprep.subr.bf16.mxu0 0
        %800 = vmatpush1.bf16.msra.mxu0 0
        %801 = vmatprep.subr.bf16.mxu0 0
        %802 = vmatpush1.bf16.msra.mxu0 0
        %803 = vmatprep.subr.bf16.mxu0 0
        %804 = vmatpush1.bf16.msra.mxu0 0
        %805 = vmatprep.subr.bf16.mxu0 0
        %806 = vmatpush1.bf16.msra.mxu0 0
        %807 = vmatprep.subr.bf16.mxu0 0
        %808 = vmatpush1.bf16.msra.mxu0 0
        %809 = vmatprep.subr.bf16.mxu0 0
        %810 = vmatpush1.bf16.msra.mxu0 0
        %811 = vmatprep.subr.bf16.mxu0 0
        %812 = vmatpush1.bf16.msra.mxu0 0
        %813 = vmatprep.subr.bf16.mxu0 0
        %814 = vmatpush1.bf16.msra.mxu0 0
        %815 = vmatprep.mubr.bf16.mxu0 0
        %816 = vmatmul.mubr.bf16.gmra.mrb[0].mxu0 %v778
        %v817 = vpop.f32.mrb[0].mxu0
        %v818 = vadd.f32 0.0, %v817
        %v819 = vpop.f32.mrb[0].mxu0
        %v820 = vpop.f32.mrb[0].mxu0
        %v821 = vpop.f32.mrb[0].mxu0
        %822 = vdwg.mxu0
        %v823 = vpack.c.bf16 %v717, %v717
        %v824 = vpack.c.bf16 %v818, %v818
        %v825 = vld [vmem:[%s4] sm:$0xf]
        %v826 = vld [vmem:[%s4 + $0x4] sm:$0xf]
        %v827 = vld [vmem:[%s4 + $0x8] sm:$0xf]
        %v828 = vld [vmem:[%s4 + $0xc] sm:$0xf]
        %v829 = vld [vmem:[%s4 + $0x10] sm:$0xf]
        %v830 = vld [vmem:[%s4 + $0x14] sm:$0xf]
        %v831 = vld [vmem:[%s4 + $0x18] sm:$0xf]
        %v832 = vld [vmem:[%s4 + $0x1c] sm:$0xf]
        %v833 = vld [vmem:[%s4 + $0x20] sm:$0xf]
        %v834 = vld [vmem:[%s4 + $0x24] sm:$0xf]
        %v835 = vld [vmem:[%s4 + $0x28] sm:$0xf]
        %v836 = vld [vmem:[%s4 + $0x2c] sm:$0xf]
        %v837 = vld [vmem:[%s4 + $0x30] sm:$0xf]
        %v838 = vld [vmem:[%s4 + $0x34] sm:$0xf]
        %v839 = vld [vmem:[%s4 + $0x38] sm:$0xf]
        %v840 = vld [vmem:[%s4 + $0x3c] sm:$0xf]
        %v841 = vld [vmem:[%s4 + $0x40] sm:$0xf]
        %v842 = vld [vmem:[%s4 + $0x44] sm:$0xf]
        %v843 = vld [vmem:[%s4 + $0x48] sm:$0xf]
        %v844 = vld [vmem:[%s4 + $0x4c] sm:$0xf]
        %v845 = vld [vmem:[%s4 + $0x50] sm:$0xf]
        %v846 = vld [vmem:[%s4 + $0x54] sm:$0xf]
        %v847 = vld [vmem:[%s4 + $0x58] sm:$0xf]
        %v848 = vld [vmem:[%s4 + $0x5c] sm:$0xf]
        %v849 = vld [vmem:[%s4 + $0x60] sm:$0xf]
        %v850 = vld [vmem:[%s4 + $0x64] sm:$0xf]
        %v851 = vld [vmem:[%s4 + $0x68] sm:$0xf]
        %v852 = vld [vmem:[%s4 + $0x6c] sm:$0xf]
        %v853 = vld [vmem:[%s4 + $0x70] sm:$0xf]
        %v854 = vld [vmem:[%s4 + $0x74] sm:$0xf]
        %v855 = vld [vmem:[%s4 + $0x78] sm:$0xf]
        %v856 = vld [vmem:[%s4 + $0x7c] sm:$0xf]
        %v857 = vlaneseq
        %v858 = vshrl.u32 %v857, 7
        %v859 = vsub.s32 0, %v858
        %v860 = vrot.slane %v387, %v859
        %v893 = vunpack.c.l.b16 %v825
        %v894 = vunpack.c.l.b16 %v826
        %v895 = vunpack.c.l.b16 %v827
        %v896 = vunpack.c.l.b16 %v828
        %v897 = vunpack.c.l.b16 %v829
        %v898 = vunpack.c.l.b16 %v830
        %v899 = vunpack.c.l.b16 %v831
        %v900 = vunpack.c.l.b16 %v832
        %v901 = vunpack.c.l.b16 %v833
        %v902 = vunpack.c.l.b16 %v834
        %v903 = vunpack.c.l.b16 %v835
        %v904 = vunpack.c.l.b16 %v836
        %v905 = vunpack.c.l.b16 %v837
        %v906 = vunpack.c.l.b16 %v838
        %v907 = vunpack.c.l.b16 %v839
        %v908 = vunpack.c.l.b16 %v840
        %v909 = vunpack.c.l.b16 %v841
        %v910 = vunpack.c.l.b16 %v842
        %v911 = vunpack.c.l.b16 %v843
        %v912 = vunpack.c.l.b16 %v844
        %v913 = vunpack.c.l.b16 %v845
        %v914 = vunpack.c.l.b16 %v846
        %v915 = vunpack.c.l.b16 %v847
        %v916 = vunpack.c.l.b16 %v848
        %v917 = vunpack.c.l.b16 %v849
        %v918 = vunpack.c.l.b16 %v850
        %v919 = vunpack.c.l.b16 %v851
        %v920 = vunpack.c.l.b16 %v852
        %v921 = vunpack.c.l.b16 %v853
        %v922 = vunpack.c.l.b16 %v854
        %v923 = vunpack.c.l.b16 %v855
        %v924 = vunpack.c.l.b16 %v856
        %v925 = vpack.c.b16 %v894, %v893
        %v926 = vpack.c.b16 %v896, %v895
        %v927 = vpack.c.b16 %v898, %v897
        %v928 = vpack.c.b16 %v900, %v899
        %v929 = vpack.c.b16 %v902, %v901
        %v930 = vpack.c.b16 %v904, %v903
        %v931 = vpack.c.b16 %v906, %v905
        %v932 = vpack.c.b16 %v908, %v907
        %v933 = vpack.c.b16 %v910, %v909
        %v934 = vpack.c.b16 %v912, %v911
        %v935 = vpack.c.b16 %v914, %v913
        %v936 = vpack.c.b16 %v916, %v915
        %v937 = vpack.c.b16 %v918, %v917
        %v938 = vpack.c.b16 %v920, %v919
        %v939 = vpack.c.b16 %v922, %v921
        %v940 = vpack.c.b16 %v924, %v923
        %957 = vmatprep.subr.bf16.mxu0 0
        %958 = vmatpush1.bf16.msra.mxu0 %v925
        %959 = vmatprep.subr.bf16.mxu0 0
        %960 = vmatpush1.bf16.msra.mxu0 %v926
        %961 = vmatprep.subr.bf16.mxu0 0
        %962 = vmatpush1.bf16.msra.mxu0 %v927
        %963 = vmatprep.subr.bf16.mxu0 0
        %964 = vmatpush1.bf16.msra.mxu0 %v928
        %965 = vmatprep.subr.bf16.mxu0 0
        %966 = vmatpush1.bf16.msra.mxu0 %v929
        %967 = vmatprep.subr.bf16.mxu0 0
        %968 = vmatpush1.bf16.msra.mxu0 %v930
        %969 = vmatprep.subr.bf16.mxu0 0
        %970 = vmatpush1.bf16.msra.mxu0 %v931
        %971 = vmatprep.subr.bf16.mxu0 0
        %972 = vmatpush1.bf16.msra.mxu0 %v932
        %973 = vmatprep.subr.bf16.mxu0 0
        %974 = vmatpush1.bf16.msra.mxu0 %v933
        %975 = vmatprep.subr.bf16.mxu0 0
        %976 = vmatpush1.bf16.msra.mxu0 %v934
        %977 = vmatprep.subr.bf16.mxu0 0
        %978 = vmatpush1.bf16.msra.mxu0 %v935
        %979 = vmatprep.subr.bf16.mxu0 0
        %980 = vmatpush1.bf16.msra.mxu0 %v936
        %981 = vmatprep.subr.bf16.mxu0 0
        %982 = vmatpush1.bf16.msra.mxu0 %v937
        %983 = vmatprep.subr.bf16.mxu0 0
        %984 = vmatpush1.bf16.msra.mxu0 %v938
        %985 = vmatprep.subr.bf16.mxu0 0
        %986 = vmatpush1.bf16.msra.mxu0 %v939
        %987 = vmatprep.subr.bf16.mxu0 0
        %988 = vmatpush1.bf16.msra.mxu0 %v940
        %989 = vmatprep.mubr.bf16.mxu0 %v824
        %990 = vmatmul.mubr.bf16.gmra.mrb[0].mxu0 %v823
        %v991 = vpop.f32.mrb[0].mxu0
        %v992 = vadd.f32 %v860, %v991
        %v993 = vpop.f32.mrb[0].mxu0
        %v994 = vpop.f32.mrb[0].mxu0
        %v995 = vpop.f32.mrb[0].mxu0
        %996 = vdwg.mxu0
        %v997 = vadd.f32 %v992, %v385
        %v998 = vsel %vm492, %v997, 0.0
        %999 = vadd.xlane.f32.xlu0 %v998
        %v1000 = vpop.xlane.xlu0 %999
        %v1001 = vrcp.pop 32.0
        %v1002 = vmul.f32 %v1000, %v1001
        %v1003 = vsub.f32 %v997, %v1002
        %v1004 = vmul.f32 %v1003, %v1003
        %v1005 = vsel %vm492, %v1004, 0.0
        %1006 = vadd.xlane.f32.xlu0 %v1005
        %v1007 = vpop.xlane.xlu0 %1006
        %v1008 = vmul.f32 %v1007, %v1001
        %v1009 = vadd.f32 %v1008, 1e-05
        %v1010 = vrsqrt.pop %v1009
        %v1011 = vmul.f32 %v1003, %v1010
        %v1012 = vlaneseq
        %v1013 = vshrl.u32 %v1012, 7
        %v1014 = vsub.s32 1, %v1013
        %v1015 = vrot.slane %v387, %v1014
        %v1016 = vmul.f32 %v1011, %v1015
        %v1017 = vlaneseq
        %v1018 = vshrl.u32 %v1017, 7
        %v1019 = vsub.s32 2, %v1018
        %v1020 = vrot.slane %v387, %v1019
        %v1021 = vadd.f32 %v1016, %v1020
        %v1022 = vpack.c.bf16 %v1021, %v1021
        %v1023 = vld [vmem:[%s6] sm:$0xf]
        %v1024 = vld [vmem:[%s6 + $0x4] sm:$0xf]
        %v1025 = vld [vmem:[%s6 + $0x8] sm:$0xf]
        %v1026 = vld [vmem:[%s6 + $0xc] sm:$0xf]
        %v1027 = vld [vmem:[%s7] sm:$0x1]
        %v1029 = vlaneseq
        %v1030 = vshrl.u32 %v1029, 7
        %v1031 = vsub.s32 0, %v1030
        %v1032 = vrot.slane %v1027, %v1031
        %v1038 = vunpack.c.l.b16 %v1023
        %v1039 = vunpack.c.l.b16 %v1024
        %v1040 = vunpack.c.l.b16 %v1025
        %v1041 = vunpack.c.l.b16 %v1026
        %v1042 = vpack.c.b16 %v1039, %v1038
        %v1043 = vpack.c.b16 %v1041, %v1040
        %v1047 = vsel %vm492, %v1022, 0
        %1049 = vmatprep.subr.bf16.mxu0 0
        %1050 = vmatpush1.bf16.msra.mxu0 %v1042
        %1051 = vmatprep.subr.bf16.mxu0 0
        %1052 = vmatpush1.bf16.msra.mxu0 %v1043
        %1053 = vmatprep.subr.bf16.mxu0 0
        %1054 = vmatpush1.bf16.msra.mxu0 0
        %1055 = vmatprep.subr.bf16.mxu0 0
        %1056 = vmatpush1.bf16.msra.mxu0 0
        %1057 = vmatprep.subr.bf16.mxu0 0
        %1058 = vmatpush1.bf16.msra.mxu0 0
        %1059 = vmatprep.subr.bf16.mxu0 0
        %1060 = vmatpush1.bf16.msra.mxu0 0
        %1061 = vmatprep.subr.bf16.mxu0 0
        %1062 = vmatpush1.bf16.msra.mxu0 0
        %1063 = vmatprep.subr.bf16.mxu0 0
        %1064 = vmatpush1.bf16.msra.mxu0 0
        %1065 = vmatprep.subr.bf16.mxu0 0
        %1066 = vmatpush1.bf16.msra.mxu0 0
        %1067 = vmatprep.subr.bf16.mxu0 0
        %1068 = vmatpush1.bf16.msra.mxu0 0
        %1069 = vmatprep.subr.bf16.mxu0 0
        %1070 = vmatpush1.bf16.msra.mxu0 0
        %1071 = vmatprep.subr.bf16.mxu0 0
        %1072 = vmatpush1.bf16.msra.mxu0 0
        %1073 = vmatprep.subr.bf16.mxu0 0
        %1074 = vmatpush1.bf16.msra.mxu0 0
        %1075 = vmatprep.subr.bf16.mxu0 0
        %1076 = vmatpush1.bf16.msra.mxu0 0
        %1077 = vmatprep.subr.bf16.mxu0 0
        %1078 = vmatpush1.bf16.msra.mxu0 0
        %1079 = vmatprep.subr.bf16.mxu0 0
        %1080 = vmatpush1.bf16.msra.mxu0 0
        %1081 = vmatprep.mubr.bf16.mxu0 0
        %1082 = vmatmul.mubr.bf16.gmra.mrb[0].mxu0 %v1047
        %v1083 = vpop.f32.mrb[0].mxu0
        %v1084 = vadd.f32 %v1032, %v1083
        %v1085 = vpop.f32.mrb[0].mxu0
        %v1086 = vpop.f32.mrb[0].mxu0
        %v1087 = vpop.f32.mrb[0].mxu0
        %1088 = vdwg.mxu0
        %v1089 = vmax.f32 %v1084, 0.0
        %v1090 = vpack.c.bf16 %v1089, %v1089
        %v1091 = vld [vmem:[%s8] sm:$0xf]
        %v1092 = vld [vmem:[%s8 + $0x4] sm:$0xf]
        %v1093 = vld [vmem:[%s8 + $0x8] sm:$0xf]
        %v1094 = vld [vmem:[%s8 + $0xc] sm:$0xf]
        %v1095 = vld [vmem:[%s8 + $0x10] sm:$0xf]
        %v1096 = vld [vmem:[%s8 + $0x14] sm:$0xf]
        %v1097 = vld [vmem:[%s8 + $0x18] sm:$0xf]
        %v1098 = vld [vmem:[%s8 + $0x1c] sm:$0xf]
        %v1099 = vlaneseq
        %v1100 = vshrl.u32 %v1099, 7
        %v1101 = vsub.s32 3, %v1100
        %v1102 = vrot.slane %v387, %v1101
        %v1111 = vunpack.c.l.b16 %v1091
        %v1112 = vunpack.c.l.b16 %v1092
        %v1113 = vunpack.c.l.b16 %v1093
        %v1114 = vunpack.c.l.b16 %v1094
        %v1115 = vunpack.c.l.b16 %v1095
        %v1116 = vunpack.c.l.b16 %v1096
        %v1117 = vunpack.c.l.b16 %v1097
        %v1118 = vunpack.c.l.b16 %v1098
        %v1119 = vpack.c.b16 %v1112, %v1111
        %v1120 = vpack.c.b16 %v1114, %v1113
        %v1121 = vpack.c.b16 %v1116, %v1115
        %v1122 = vpack.c.b16 %v1118, %v1117
        %vm1127 = vcmask 523264
        %v1129 = vsel %vm1127, %v1090, 0
        %1131 = vmatprep.subr.bf16.mxu0 0
        %1132 = vmatpush1.bf16.msra.mxu0 %v1119
        %1133 = vmatprep.subr.bf16.mxu0 0
        %1134 = vmatpush1.bf16.msra.mxu0 %v1120
        %1135 = vmatprep.subr.bf16.mxu0 0
        %1136 = vmatpush1.bf16.msra.mxu0 %v1121
        %1137 = vmatprep.subr.bf16.mxu0 0
        %1138 = vmatpush1.bf16.msra.mxu0 %v1122
        %1139 = vmatprep.subr.bf16.mxu0 0
        %1140 = vmatpush1.bf16.msra.mxu0 0
        %1141 = vmatprep.subr.bf16.mxu0 0
        %1142 = vmatpush1.bf16.msra.mxu0 0
        %1143 = vmatprep.subr.bf16.mxu0 0
        %1144 = vmatpush1.bf16.msra.mxu0 0
        %1145 = vmatprep.subr.bf16.mxu0 0
        %1146 = vmatpush1.bf16.msra.mxu0 0
        %1147 = vmatprep.subr.bf16.mxu0 0
        %1148 = vmatpush1.bf16.msra.mxu0 0
        %1149 = vmatprep.subr.bf16.mxu0 0
        %1150 = vmatpush1.bf16.msra.mxu0 0
        %1151 = vmatprep.subr.bf16.mxu0 0
        %1152 = vmatpush1.bf16.msra.mxu0 0
        %1153 = vmatprep.subr.bf16.mxu0 0
        %1154 = vmatpush1.bf16.msra.mxu0 0
        %1155 = vmatprep.subr.bf16.mxu0 0
        %1156 = vmatpush1.bf16.msra.mxu0 0
        %1157 = vmatprep.subr.bf16.mxu0 0
        %1158 = vmatpush1.bf16.msra.mxu0 0
        %1159 = vmatprep.subr.bf16.mxu0 0
        %1160 = vmatpush1.bf16.msra.mxu0 0
        %1161 = vmatprep.subr.bf16.mxu0 0
        %1162 = vmatpush1.bf16.msra.mxu0 0
        %1163 = vmatprep.mubr.bf16.mxu0 0
        %1164 = vmatmul.mubr.bf16.gmra.mrb[0].mxu0 %v1129
        %v1165 = vpop.f32.mrb[0].mxu0
        %v1166 = vadd.f32 %v1102, %v1165
        %v1167 = vpop.f32.mrb[0].mxu0
        %v1168 = vpop.f32.mrb[0].mxu0
        %v1169 = vpop.f32.mrb[0].mxu0
        %1170 = vdwg.mxu0
        %v1171 = vadd.f32 %v1166, %v1021
        %v1172 = vsel %vm492, %v1171, 0.0
        %1173 = vadd.xlane.f32.xlu0 %v1172
        %v1174 = vpop.xlane.xlu0 %1173
        %v1175 = vmul.f32 %v1174, %v1001
        %v1176 = vsub.f32 %v1171, %v1175
        %v1177 = vmul.f32 %v1176, %v1176
        %v1178 = vsel %vm492, %v1177, 0.0
        %1179 = vadd.xlane.f32.xlu0 %v1178
        %v1180 = vpop.xlane.xlu0 %1179
        %v1181 = vmul.f32 %v1180, %v1001
        %v1182 = vadd.f32 %v1181, 1e-05
        %v1183 = vrsqrt.pop %v1182
        %v1184 = vmul.f32 %v1176, %v1183
        %v1185 = vlaneseq
        %v1186 = vshrl.u32 %v1185, 7
        %v1187 = vsub.s32 4, %v1186
        %v1188 = vrot.slane %v387, %v1187
        %v1189 = vmul.f32 %v1184, %v1188
        %v1190 = vlaneseq
        %v1191 = vshrl.u32 %v1190, 7
        %v1192 = vsub.s32 5, %v1191
        %v1193 = vrot.slane %v387, %v1192
        %v1194 = vadd.f32 %v1189, %v1193
        %v1195 = vpack.c.bf16 %v1194, %v1194
        %v1196 = vld [vmem:[%s9] sm:$0xf]
        %v1197 = vld [vmem:[%s9 + $0x4] sm:$0xf]
        %v1198 = vld [vmem:[%s9 + $0x8] sm:$0xf]
        %v1199 = vld [vmem:[%s9 + $0xc] sm:$0xf]
        %v1200 = vld [vmem:[%s10] sm:$0x1]
        %v1202 = vlaneseq
        %v1203 = vshrl.u32 %v1202, 7
        %v1204 = vsub.s32 0, %v1203
        %v1205 = vrot.slane %v1200, %v1204
        %v1211 = vunpack.c.l.b16 %v1196
        %v1212 = vunpack.c.l.b16 %v1197
        %v1213 = vunpack.c.l.b16 %v1198
        %v1214 = vunpack.c.l.b16 %v1199
        %v1215 = vpack.c.b16 %v1212, %v1211
        %v1216 = vpack.c.b16 %v1214, %v1213
        %v1220 = vsel %vm492, %v1195, 0
        %1222 = vmatprep.subr.bf16.mxu0 0
        %1223 = vmatpush1.bf16.msra.mxu0 %v1215
        %1224 = vmatprep.subr.bf16.mxu0 0
        %1225 = vmatpush1.bf16.msra.mxu0 %v1216
        %1226 = vmatprep.subr.bf16.mxu0 0
        %1227 = vmatpush1.bf16.msra.mxu0 0
        %1228 = vmatprep.subr.bf16.mxu0 0
        %1229 = vmatpush1.bf16.msra.mxu0 0
        %1230 = vmatprep.subr.bf16.mxu0 0
        %1231 = vmatpush1.bf16.msra.mxu0 0
        %1232 = vmatprep.subr.bf16.mxu0 0
        %1233 = vmatpush1.bf16.msra.mxu0 0
        %1234 = vmatprep.subr.bf16.mxu0 0
        %1235 = vmatpush1.bf16.msra.mxu0 0
        %1236 = vmatprep.subr.bf16.mxu0 0
        %1237 = vmatpush1.bf16.msra.mxu0 0
        %1238 = vmatprep.subr.bf16.mxu0 0
        %1239 = vmatpush1.bf16.msra.mxu0 0
        %1240 = vmatprep.subr.bf16.mxu0 0
        %1241 = vmatpush1.bf16.msra.mxu0 0
        %1242 = vmatprep.subr.bf16.mxu0 0
        %1243 = vmatpush1.bf16.msra.mxu0 0
        %1244 = vmatprep.subr.bf16.mxu0 0
        %1245 = vmatpush1.bf16.msra.mxu0 0
        %1246 = vmatprep.subr.bf16.mxu0 0
        %1247 = vmatpush1.bf16.msra.mxu0 0
        %1248 = vmatprep.subr.bf16.mxu0 0
        %1249 = vmatpush1.bf16.msra.mxu0 0
        %1250 = vmatprep.subr.bf16.mxu0 0
        %1251 = vmatpush1.bf16.msra.mxu0 0
        %1252 = vmatprep.subr.bf16.mxu0 0
        %1253 = vmatpush1.bf16.msra.mxu0 0
        %1254 = vmatprep.mubr.bf16.mxu0 0
        %1255 = vmatmul.mubr.bf16.gmra.mrb[0].mxu0 %v1220
        %v1256 = vpop.f32.mrb[0].mxu0
        %v1257 = vadd.f32 %v1205, %v1256
        %v1258 = vpop.f32.mrb[0].mxu0
        %v1259 = vpop.f32.mrb[0].mxu0
        %v1260 = vpop.f32.mrb[0].mxu0
        %1261 = vdwg.mxu0
        %1262 = vst [vmem:[%s377] sm:$0xff] %v1257
        %s1263 = sand.u32 %s269, 1
        %s1264 = scalar_lea.sflag [#allocation3], %s1263
        %s1265 = sand.u32 %s269, 1
        %s1266 = smul.addr %s1265, 8
        %s1267 = scalar_lea.vmem [#allocation2], %s1266
        // Predicated region
        $region65: #{tpu_custom_call.1} parent=63 // pred_check
          %p1268 = pneg %p279
        $region66: #{tpu_custom_call.1} parent=63 // pred_check_branch
          %1270 = sbr.rel (%p1268) target = $region68
        $region67: #{tpu_custom_call.1} parent=63 // pred_region
          %s1272 = ssub.s32 128, 128
          %1273 = vsyncadd %s1264, %s1272
          %s1274 = smul.addr %s25, 128
          %s1275 = scalar_lea.hbm %s11, %s1274
          %s1277 = sshll.u32 %s1267, 4
          %s1278 = int_to_ptr.vmem [resolvable:$true] %s1277
          %1280 = dma.vmem_to_hbm [thread:$0]  %s1278, 128, %s1275, %s1264
        $region68: #{tpu_custom_call.1} parent=63 // pred_fallthru
          _
      $region64: #{tpu_custom_call.1} parent=5 // pred_fallthru
        _
      %p1281 = scmp.le.s32.totalorder 2, %s20
      // Predicated region
      $region69: #{tpu_custom_call.1} parent=5 // pred_check
        %p1282 = pneg %p1281
      $region70: #{tpu_custom_call.1} parent=5 // pred_check_branch
        %1284 = sbr.rel (%p1282) target = $region72
      $region71: #{tpu_custom_call.1} parent=5 // pred_region
        %s1285 = ssub.s32 %s20, 2
        // Predicated region
        $region73: #{tpu_custom_call.1} parent=71 // pred_check
          %p1286 = pneg %p285
        $region74: #{tpu_custom_call.1} parent=71 // pred_check_branch
          %1288 = sbr.rel (%p1286) target = $region76
        $region75: #{tpu_custom_call.1} parent=71 // pred_region
          %s1289 = sand.u32 %s270, 1
          %s1290 = scalar_lea.sflag [#allocation3], %s1289
          %s1291 = sand.u32 %s270, 1
          %s1292 = smul.addr %s1291, 8
          %s1293 = scalar_lea.vmem [#allocation2], %s1292
          %1294 = dma.done %s1290, 128
        $region76: #{tpu_custom_call.1} parent=71 // pred_fallthru
          _
      $region72: #{tpu_custom_call.1} parent=5 // pred_fallthru
        _
    $region6: #{tpu_custom_call.1} parent=1 // loop_footer
      %s24 = sadd.s32 1, %s20
    $region7: #{tpu_custom_call.1} parent=1 // loop_footer_branch
      %19 = sbr.rel target = $region3
    $region8: #{tpu_custom_call.1} parent=1 // loop_exit
      _
    %1295 = vsyncpa [#allocation3], 1
    %s1296 = scalar_lea.sflag [#allocation3], 1
    %1297 = vsyncpa %s1296, 1

</llo_original>
